<compile_context>
chip_gen: v7x
topology: tpu7x:2x2x1
jax: 0.10.0
libtpu: 0.0.40
codegen_flags: <defaults>
</compile_context>

<pallas_src>
import functools

import jax
import jax.numpy as jnp
from jax.experimental import pallas as pl
from jax.experimental.pallas import tpu as pltpu

EPS = 1e-5
# Above every scoped default (16 MiB v5e / 32 MiB v6e,v7x), below every
# physical capacity (64 MiB v7x / 128 MiB v5e,v6e).
_VMEM_LIMIT_BYTES = 48 * 1024 * 1024


def _single_buffered_spec(block_shape, index_map):
    """BlockSpec for grid-resident operands (constant index_map).

    Requests a single VMEM buffer (double-buffering a constant operand is pure
    VMEM waste — at C=512 the flat conv weight is ~9.4 MiB f32 per buffer).
    Falls back to a plain BlockSpec if this JAX build lacks pipeline_mode.
    """
    try:
        return pl.BlockSpec(block_shape, index_map, pipeline_mode=pl.Buffered(1))
    except (TypeError, AttributeError):
        return pl.BlockSpec(block_shape, index_map)


# --------------------------------------------------------------------------
# In-kernel helper: 3x3 "same" convolution of one sample in (Cin, H*W) layout
# as a single K = 9*Cin MXU matmul.
# --------------------------------------------------------------------------
def _conv3x3_gemm(a, w_flat, H, W):
    """a: (Cin, H*W) activations; w_flat: (Cout, 9*Cin); returns (Cout, H*W) f32.

    Shifted windows come from pltpu.roll along the lane axis (XLU) + boundary
    masks; all 9 taps are stacked along the channel (sublane) axis so the conv
    is ONE dot with contraction 9*Cin (fills the MXU, no VPU accumulate chain).
    """
    Cin, HW = a.shape
    pos = jax.lax.broadcasted_iota(jnp.int32, (1, HW), 1)   # flattened h*W + w
    col = pos % W
    row_ok = {0: pos >= W, 1: None, 2: pos < (H - 1) * W}   # h-1 / h / h+1 exists
    col_ok = {0: col >= 1, 1: None, 2: col <= W - 2}        # w-1 / w / w+1 exists

    taps = []
    for ky in range(3):
        for kx in range(3):
            off = (ky - 1) * W + (kx - 1)
            # rolled[p] == a[(p + off) % HW]  (lane rotation, no VMEM copy)
            t = a if off == 0 else pltpu.roll(a, shift=(-off) % HW, axis=1)
            mask = row_ok[ky]
            if col_ok[kx] is not None:
                mask = col_ok[kx] if mask is None else jnp.logical_and(mask, col_ok[kx])
            if mask is not None:
                t = jnp.where(mask, t, 0.0)          # no materialized zeros buffer
            taps.append(t)
    k_op = jnp.concatenate(taps, axis=0)             # (9*Cin, HW)
    return jnp.dot(w_flat, k_op, preferred_element_type=jnp.float32)


def _channel_moments(y):
    """Per-channel sum and sum-of-squares of y (Cout, HW), computed as MXU dots
    against a ones column so the lane reduction stays off the XLU (which
    already carries the 8 tap rolls)."""
    ones = jnp.ones((y.shape[1], 1), jnp.float32)
    s = jnp.dot(y, ones, preferred_element_type=jnp.float32)        # (Cout, 1)
    ss = jnp.dot(y * y, ones, preferred_element_type=jnp.float32)   # (Cout, 1)
    return s, ss


# --------------------------------------------------------------------------
# Phase 1: conv1 + per-sample partial BN1 moments (single fused pass).
# --------------------------------------------------------------------------
def _conv1_stats_kernel(x_ref, w_ref, y_ref, s_ref, ss_ref, *, H, W):
    y = _conv3x3_gemm(x_ref[0], w_ref[...], H, W)        # (Cout, HW) f32
    y_ref[0] = y.astype(y_ref.dtype)                     # compute_dtype intermediate
    s, ss = _channel_moments(y)
    s_ref[0] = s
    ss_ref[0] = ss


# --------------------------------------------------------------------------
# Phase 2: apply BN1 affine + ReLU, conv2, per-sample partial BN2 moments.
# --------------------------------------------------------------------------
def _bn_relu_conv2_stats_kernel(y1_ref, sc_ref, sh_ref, w_ref,
                                y_ref, s_ref, ss_ref, *, H, W, conv_dtype):
    a = jnp.maximum(y1_ref[0].astype(jnp.float32) * sc_ref[...] + sh_ref[...], 0.0)
    y = _conv3x3_gemm(a.astype(conv_dtype), w_ref[...], H, W)
    y_ref[0] = y.astype(y_ref.dtype)
    s, ss = _channel_moments(y)
    s_ref[0] = s
    ss_ref[0] = ss


# --------------------------------------------------------------------------
# Phase 3: BN2 affine + identity shortcut + ReLU (lane-dense elementwise).
# --------------------------------------------------------------------------
def _bn_residual_relu_kernel(y2_ref, x_ref, sc_ref, sh_ref, o_ref):
    res = x_ref[0].astype(jnp.float32)
    out = jnp.maximum(
        y2_ref[0].astype(jnp.float32) * sc_ref[...] + sh_ref[...] + res, 0.0)
    o_ref[0] = out.astype(o_ref.dtype)


# --------------------------------------------------------------------------
# Cross-sample BN stat combination (tiny, plain XLA between phases).
# Returns (C,1) scale/shift with  bn(x) = x * scale + shift  (training stats).
# --------------------------------------------------------------------------
def _bn_affine_from_moments(s, ss, gamma, beta, count):
    C = s.shape[1]
    mean = jnp.sum(s, axis=0) / count                                  # (C, 1)
    var = jnp.maximum(jnp.sum(ss, axis=0) / count - mean * mean, 0.0)  # biased
    scale = gamma.reshape(C, 1) * jax.lax.rsqrt(var + EPS)
    shift = beta.reshape(C, 1) - mean * scale
    return scale.astype(jnp.float32), shift.astype(jnp.float32)


# --------------------------------------------------------------------------
# Wrapper: PyTorch-layout in, PyTorch-layout out.
# --------------------------------------------------------------------------
def basic_block_pallas(x, w1, g1, b1, w2, g2, b2, compute_dtype=jnp.float32):
    """x: (N, C, H, W) f32 NCHW. Weights OIHW. Returns (N, C, H, W) f32.

    compute_dtype sets the MXU operand dtype AND the inter-phase y1/y2
    activation dtype (use jnp.bfloat16 at production channel counts to halve
    HBM traffic of the forced inter-phase round trips). Stats stay float32.
    """
    N, C, H, W = x.shape
    Cout, Cin, KH, KW = w1.shape
    assert (KH, KW) == (3, 3) and Cin == C
    assert Cout == C, "identity shortcut requires stride == 1 and in_planes == planes"
    HW = H * W
    f32 = jnp.float32

    x_flat = x.reshape(N, C, HW)                     # NCHW flattened: no transpose
    x_cd = x_flat.astype(compute_dtype)
    # OIHW -> (Cout, ky, kx, Cin) -> (Cout, 9*Cin): tap-major flat weights for
    # the single K = 9*Cin matmul (order matches the tap stacking in-kernel).
    w1f = jnp.transpose(w1, (0, 2, 3, 1)).reshape(Cout, 9 * Cin).astype(compute_dtype)
    w2f = jnp.transpose(w2, (0, 2, 3, 1)).reshape(Cout, 9 * Cout).astype(compute_dtype)

    # Block specs: one sample per grid step; minor dim = H*W (lane-dense here).
    act_spec = pl.BlockSpec((1, C, HW), lambda n: (n, 0, 0))
    wt_spec = _single_buffered_spec((Cout, 9 * Cin), lambda n: (0, 0))
    ch_spec = _single_buffered_spec((Cout, 1), lambda n: (0, 0))
    st_spec = pl.BlockSpec((1, Cout, 1), lambda n: (n, 0, 0))
    params = pltpu.CompilerParams(
        dimension_semantics=("parallel",),
        vmem_limit_bytes=_VMEM_LIMIT_BYTES,
    )

    act_out = jax.ShapeDtypeStruct((N, Cout, HW), compute_dtype)   # y1/y2 in compute_dtype
    st_out = jax.ShapeDtypeStruct((N, Cout, 1), f32)
    count = float(N * HW)

    # ---- phase 1: conv1 + partial BN1 moments --------------------------------
    y1, s1, ss1 = pl.pallas_call(
        functools.partial(_conv1_stats_kernel, H=H, W=W),
        grid=(N,),
        in_specs=(act_spec, wt_spec),
        out_specs=(act_spec, st_spec, st_spec),
        out_shape=(act_out, st_out, st_out),
        compiler_params=params,
    )(x_cd, w1f)
    sc1, sh1 = _bn_affine_from_moments(s1, ss1, g1, b1, count)

    # ---- phase 2: bn1 + relu + conv2 + partial BN2 moments --------------------
    y2, s2, ss2 = pl.pallas_call(
        functools.partial(_bn_relu_conv2_stats_kernel, H=H, W=W,
                          conv_dtype=compute_dtype),
        grid=(N,),
        in_specs=(act_spec, ch_spec, ch_spec, wt_spec),
        out_specs=(act_spec, st_spec, st_spec),
        out_shape=(act_out, st_out, st_out),
        compiler_params=params,
    )(y1, sc1, sh1, w2f)
    sc2, sh2 = _bn_affine_from_moments(s2, ss2, g2, b2, count)

    # ---- phase 3: bn2 + identity shortcut + relu ------------------------------
    out = pl.pallas_call(
        _bn_residual_relu_kernel,
        grid=(N,),
        in_specs=(act_spec, act_spec, ch_spec, ch_spec),
        out_specs=act_spec,
        out_shape=jax.ShapeDtypeStruct((N, Cout, HW), f32),
        compiler_params=params,
    )(y2, x_flat, sc2, sh2)

    return out.reshape(N, C, H, W)


# ---------------- pure-JAX reference (mirrors the PyTorch forward) ----------------
def basic_block_ref(x, w1, g1, b1, w2, g2, b2):
    def conv3(x_, w_):
        return jax.lax.conv_general_dilated(
            x_, w_, window_strides=(1, 1), padding=((1, 1), (1, 1)),
            dimension_numbers=("NCHW", "OIHW", "NCHW"))

    def bn(x_, g_, b_):
        mean = x_.mean(axis=(0, 2, 3), keepdims=True)
        var = ((x_ - mean) ** 2).mean(axis=(0, 2, 3), keepdims=True)
        return ((x_ - mean) / jnp.sqrt(var + EPS)) * g_.reshape(1, -1, 1, 1) \
               + b_.reshape(1, -1, 1, 1)

    out = jax.nn.relu(bn(conv3(x, w1), g1, b1))
    out = bn(conv3(out, w2), g2, b2)
    return jax.nn.relu(out + x)


if __name__ == "__main__":
    key = jax.random.PRNGKey(0)
    N, C, H, W = 2, 4, 16, 16   # in_planes = planes = 4, stride = 1

    k = jax.random.split(key, 7)
    x = jax.random.normal(k[0], (N, C, H, W), jnp.float32)
    w1 = jax.random.normal(k[1], (C, C, 3, 3), jnp.float32) * 0.2   # OIHW
    w2 = jax.random.normal(k[2], (C, C, 3, 3), jnp.float32) * 0.2   # OIHW
    g1 = 1.0 + 0.1 * jax.random.normal(k[3], (C,), jnp.float32)
    b1 = 0.1 * jax.random.normal(k[4], (C,), jnp.float32)
    g2 = 1.0 + 0.1 * jax.random.normal(k[5], (C,), jnp.float32)
    b2 = 0.1 * jax.random.normal(k[6], (C,), jnp.float32)

    ref = jax.block_until_ready(basic_block_ref(x, w1, g1, b1, w2, g2, b2))
    fn = jax.jit(basic_block_pallas, static_argnames=("compute_dtype",))

    # float32 MXU path: tight match against the PyTorch-equivalent reference.
    out = jax.block_until_ready(fn(x, w1, g1, b1, w2, g2, b2,
                                   compute_dtype=jnp.float32))
    assert out.shape == (N, C, H, W)
    err = float(jnp.max(jnp.abs(out - ref)))
    assert err < 1e-3, f"f32 max abs err {err}"

    # bf16 MXU operands + bf16 inter-phase activations (production config):
    # coarse sanity bound (bf16 rounding), mainly proves the path runs on HW.
    out_bf16 = jax.block_until_ready(fn(x, w1, g1, b1, w2, g2, b2,
                                        compute_dtype=jnp.bfloat16))
    err_bf16 = float(jnp.max(jnp.abs(out_bf16 - ref)))
    assert err_bf16 < 0.3, f"bf16 max abs err {err_bf16}"

    print("KERNEL_OK")
</pallas_src>

<mosaic_0001>
module attributes {stable_mosaic.version = 11 : i64} {
  func.func @_conv1_stats_kernel(%arg0: i32, %arg1: memref<1x4x256xf32, #tpu.memory_space<vmem>>, %arg2: memref<4x36xf32, #tpu.memory_space<vmem>>, %arg3: memref<1x4x256xf32, #tpu.memory_space<vmem>>, %arg4: memref<1x4x1xf32, #tpu.memory_space<vmem>>, %arg5: memref<1x4x1xf32, #tpu.memory_space<vmem>>) attributes {dimension_semantics = [#tpu.dimension_semantics<parallel>], iteration_bounds = array<i64: 2>, scalar_prefetch = 0 : i64, scratch_operands = 0 : i64, tpu.core_type = #tpu.core_type<tc>, window_params = [{transform_indices = @transform_0, window_bounds = array<i64: 1, 4, 256>}, {pipeline_mode = #tpu.pipeline_mode<synchronous>, transform_indices = @transform_1, window_bounds = array<i64: 4, 36>}, {transform_indices = @transform_2, window_bounds = array<i64: 1, 4, 256>}, {transform_indices = @transform_3, window_bounds = array<i64: 1, 4, 1>}, {transform_indices = @transform_4, window_bounds = array<i64: 1, 4, 1>}]} {
    %c0 = arith.constant 0 : index
    %c0_0 = arith.constant 0 : index
    %c0_1 = arith.constant 0 : index
    %0 = vector.load %arg1[%c0, %c0_0, %c0_1] : memref<1x4x256xf32, #tpu.memory_space<vmem>>, vector<1x4x256xf32>
    %1 = vector.shape_cast %0 : vector<1x4x256xf32> to vector<4x256xf32>
    %c0_2 = arith.constant 0 : index
    %c0_3 = arith.constant 0 : index
    %2 = vector.load %arg2[%c0_2, %c0_3] : memref<4x36xf32, #tpu.memory_space<vmem>>, vector<4x36xf32>
    %3 = tpu.iota {dimensions = array<i32: 1>} : vector<1x256xi32>
    %c16_i32 = arith.constant 16 : i32
    %c0_i32 = arith.constant 0 : i32
    %4 = arith.cmpi eq, %c16_i32, %c0_i32 : i32
    %c1_i32 = arith.constant 1 : i32
    %5 = arith.select %4, %c1_i32, %c16_i32 : i32
    %6 = vector.broadcast %5 : i32 to vector<1x256xi32>
    %7 = arith.remsi %3, %6 : vector<1x256xi32>
    %c0_i32_4 = arith.constant 0 : i32
    %8 = vector.broadcast %c0_i32_4 : i32 to vector<1x256xi32>
    %9 = arith.cmpi ne, %7, %8 : vector<1x256xi32>
    %c0_i32_5 = arith.constant 0 : i32
    %10 = vector.broadcast %c0_i32_5 : i32 to vector<1x256xi32>
    %11 = arith.cmpi slt, %7, %10 : vector<1x256xi32>
    %c0_i32_6 = arith.constant 0 : i32
    %12 = arith.cmpi slt, %5, %c0_i32_6 : i32
    %13 = vector.broadcast %12 : i1 to vector<1x256xi1>
    %14 = vector.broadcast %13 : vector<1x256xi1> to vector<1x256xi1>
    %15 = arith.xori %11, %14 : vector<1x256xi1>
    %16 = arith.andi %15, %9 : vector<1x256xi1>
    %17 = vector.broadcast %5 : i32 to vector<1x256xi32>
    %18 = arith.addi %7, %17 : vector<1x256xi32>
    %19 = arith.select %16, %18, %7 : vector<1x256xi1>, vector<1x256xi32>
    %c16_i32_7 = arith.constant 16 : i32
    %20 = vector.broadcast %c16_i32_7 : i32 to vector<1x256xi32>
    %21 = arith.cmpi sge, %3, %20 : vector<1x256xi32>
    %c240_i32 = arith.constant 240 : i32
    %22 = vector.broadcast %c240_i32 : i32 to vector<1x256xi32>
    %23 = arith.cmpi slt, %3, %22 : vector<1x256xi32>
    %c1_i32_8 = arith.constant 1 : i32
    %24 = vector.broadcast %c1_i32_8 : i32 to vector<1x256xi32>
    %25 = arith.cmpi sge, %19, %24 : vector<1x256xi32>
    %c14_i32 = arith.constant 14 : i32
    %26 = vector.broadcast %c14_i32 : i32 to vector<1x256xi32>
    %27 = arith.cmpi sle, %19, %26 : vector<1x256xi32>
    %c17_i32 = arith.constant 17 : i32
    %28 = tpu.dynamic_rotate %1 by %c17_i32 dim 1 : vector<4x256xf32>, i32 -> vector<4x256xf32>
    %29 = arith.andi %21, %25 : vector<1x256xi1>
    %cst = arith.constant 0.000000e+00 : f32
    %30 = vector.shape_cast %29 : vector<1x256xi1> to vector<1x256xi1>
    %31 = vector.broadcast %30 : vector<1x256xi1> to vector<4x256xi1>
    %32 = vector.broadcast %cst : f32 to vector<4x256xf32>
    %33 = arith.select %31, %28, %32 : vector<4x256xi1>, vector<4x256xf32>
    %c16_i32_9 = arith.constant 16 : i32
    %34 = tpu.dynamic_rotate %1 by %c16_i32_9 dim 1 : vector<4x256xf32>, i32 -> vector<4x256xf32>
    %cst_10 = arith.constant 0.000000e+00 : f32
    %35 = vector.shape_cast %21 : vector<1x256xi1> to vector<1x256xi1>
    %36 = vector.broadcast %35 : vector<1x256xi1> to vector<4x256xi1>
    %37 = vector.broadcast %cst_10 : f32 to vector<4x256xf32>
    %38 = arith.select %36, %34, %37 : vector<4x256xi1>, vector<4x256xf32>
    %c15_i32 = arith.constant 15 : i32
    %39 = tpu.dynamic_rotate %1 by %c15_i32 dim 1 : vector<4x256xf32>, i32 -> vector<4x256xf32>
    %40 = arith.andi %21, %27 : vector<1x256xi1>
    %cst_11 = arith.constant 0.000000e+00 : f32
    %41 = vector.shape_cast %40 : vector<1x256xi1> to vector<1x256xi1>
    %42 = vector.broadcast %41 : vector<1x256xi1> to vector<4x256xi1>
    %43 = vector.broadcast %cst_11 : f32 to vector<4x256xf32>
    %44 = arith.select %42, %39, %43 : vector<4x256xi1>, vector<4x256xf32>
    %c1_i32_12 = arith.constant 1 : i32
    %45 = tpu.dynamic_rotate %1 by %c1_i32_12 dim 1 : vector<4x256xf32>, i32 -> vector<4x256xf32>
    %cst_13 = arith.constant 0.000000e+00 : f32
    %46 = vector.shape_cast %25 : vector<1x256xi1> to vector<1x256xi1>
    %47 = vector.broadcast %46 : vector<1x256xi1> to vector<4x256xi1>
    %48 = vector.broadcast %cst_13 : f32 to vector<4x256xf32>
    %49 = arith.select %47, %45, %48 : vector<4x256xi1>, vector<4x256xf32>
    %c255_i32 = arith.constant 255 : i32
    %50 = tpu.dynamic_rotate %1 by %c255_i32 dim 1 : vector<4x256xf32>, i32 -> vector<4x256xf32>
    %cst_14 = arith.constant 0.000000e+00 : f32
    %51 = vector.shape_cast %27 : vector<1x256xi1> to vector<1x256xi1>
    %52 = vector.broadcast %51 : vector<1x256xi1> to vector<4x256xi1>
    %53 = vector.broadcast %cst_14 : f32 to vector<4x256xf32>
    %54 = arith.select %52, %50, %53 : vector<4x256xi1>, vector<4x256xf32>
    %c241_i32 = arith.constant 241 : i32
    %55 = tpu.dynamic_rotate %1 by %c241_i32 dim 1 : vector<4x256xf32>, i32 -> vector<4x256xf32>
    %56 = arith.andi %23, %25 : vector<1x256xi1>
    %cst_15 = arith.constant 0.000000e+00 : f32
    %57 = vector.shape_cast %56 : vector<1x256xi1> to vector<1x256xi1>
    %58 = vector.broadcast %57 : vector<1x256xi1> to vector<4x256xi1>
    %59 = vector.broadcast %cst_15 : f32 to vector<4x256xf32>
    %60 = arith.select %58, %55, %59 : vector<4x256xi1>, vector<4x256xf32>
    %c240_i32_16 = arith.constant 240 : i32
    %61 = tpu.dynamic_rotate %1 by %c240_i32_16 dim 1 : vector<4x256xf32>, i32 -> vector<4x256xf32>
    %cst_17 = arith.constant 0.000000e+00 : f32
    %62 = vector.shape_cast %23 : vector<1x256xi1> to vector<1x256xi1>
    %63 = vector.broadcast %62 : vector<1x256xi1> to vector<4x256xi1>
    %64 = vector.broadcast %cst_17 : f32 to vector<4x256xf32>
    %65 = arith.select %63, %61, %64 : vector<4x256xi1>, vector<4x256xf32>
    %c239_i32 = arith.constant 239 : i32
    %66 = tpu.dynamic_rotate %1 by %c239_i32 dim 1 : vector<4x256xf32>, i32 -> vector<4x256xf32>
    %67 = arith.andi %23, %27 : vector<1x256xi1>
    %cst_18 = arith.constant 0.000000e+00 : f32
    %68 = vector.shape_cast %67 : vector<1x256xi1> to vector<1x256xi1>
    %69 = vector.broadcast %68 : vector<1x256xi1> to vector<4x256xi1>
    %70 = vector.broadcast %cst_18 : f32 to vector<4x256xf32>
    %71 = arith.select %69, %66, %70 : vector<4x256xi1>, vector<4x256xf32>
    %72 = tpu.concatenate %33, %38, %44, %49, %1, %54, %60, %65, %71 in 0 : vector<4x256xf32>, vector<4x256xf32>, vector<4x256xf32>, vector<4x256xf32>, vector<4x256xf32>, vector<4x256xf32>, vector<4x256xf32>, vector<4x256xf32>, vector<4x256xf32> -> vector<36x256xf32>
    %cst_19 = arith.constant dense<0.000000e+00> : vector<4x256xf32>
    %73 = tpu.matmul %2, %72, %cst_19 {dimension_numbers = #tpu.dot_dimension_numbers<[1], [0], [0], [1], [0, 0, 1, 1], [], []>} : vector<4x36xf32>, vector<36x256xf32>, vector<4x256xf32> -> vector<4x256xf32>
    %c0_20 = arith.constant 0 : index
    %c0_21 = arith.constant 0 : index
    %c0_22 = arith.constant 0 : index
    %74 = vector.load %arg3[%c0_20, %c0_21, %c0_22] : memref<1x4x256xf32, #tpu.memory_space<vmem>>, vector<1x4x256xf32>
    %75 = vector.shape_cast %74 : vector<1x4x256xf32> to vector<4x256xf32>
    %76 = vector.shape_cast %73 : vector<4x256xf32> to vector<1x4x256xf32>
    tpu.vector_store %arg3[%c0_20, %c0_21, %c0_22], %76 {strides = array<i32>} : memref<1x4x256xf32, #tpu.memory_space<vmem>>, vector<1x4x256xf32>,
    %cst_23 = arith.constant 1.000000e+00 : f32
    %77 = vector.broadcast %cst_23 : f32 to vector<256x1xf32>
    %cst_24 = arith.constant dense<0.000000e+00> : vector<4x1xf32>
    %78 = tpu.matmul %73, %77, %cst_24 {dimension_numbers = #tpu.dot_dimension_numbers<[1], [0], [0], [1], [0, 0, 1, 1], [], []>} : vector<4x256xf32>, vector<256x1xf32>, vector<4x1xf32> -> vector<4x1xf32>
    %79 = arith.mulf %73, %73 : vector<4x256xf32>
    %cst_25 = arith.constant dense<0.000000e+00> : vector<4x1xf32>
    %80 = tpu.matmul %79, %77, %cst_25 {dimension_numbers = #tpu.dot_dimension_numbers<[1], [0], [0], [1], [0, 0, 1, 1], [], []>} : vector<4x256xf32>, vector<256x1xf32>, vector<4x1xf32> -> vector<4x1xf32>
    %c0_26 = arith.constant 0 : index
    %c0_27 = arith.constant 0 : index
    %c0_28 = arith.constant 0 : index
    %81 = vector.load %arg4[%c0_26, %c0_27, %c0_28] : memref<1x4x1xf32, #tpu.memory_space<vmem>>, vector<1x4x1xf32>
    %82 = vector.shape_cast %81 : vector<1x4x1xf32> to vector<4x1xf32>
    %83 = vector.shape_cast %78 : vector<4x1xf32> to vector<1x4x1xf32>
    tpu.vector_store %arg4[%c0_26, %c0_27, %c0_28], %83 {strides = array<i32>} : memref<1x4x1xf32, #tpu.memory_space<vmem>>, vector<1x4x1xf32>,
    %c0_29 = arith.constant 0 : index
    %c0_30 = arith.constant 0 : index
    %c0_31 = arith.constant 0 : index
    %84 = vector.load %arg5[%c0_29, %c0_30, %c0_31] : memref<1x4x1xf32, #tpu.memory_space<vmem>>, vector<1x4x1xf32>
    %85 = vector.shape_cast %84 : vector<1x4x1xf32> to vector<4x1xf32>
    %86 = vector.shape_cast %80 : vector<4x1xf32> to vector<1x4x1xf32>
    tpu.vector_store %arg5[%c0_29, %c0_30, %c0_31], %86 {strides = array<i32>} : memref<1x4x1xf32, #tpu.memory_space<vmem>>, vector<1x4x1xf32>,
    return
  }
  func.func @transform_0(%arg0: i32) -> (i32, i32, i32) {
    %c0_i32 = arith.constant 0 : i32
    %c0_i32_0 = arith.constant 0 : i32
    %c0_i32_1 = arith.constant 0 : i32
    return %arg0, %c0_i32, %c0_i32_0 : i32, i32, i32
  }
  func.func @transform_1(%arg0: i32) -> (i32, i32) {
    %c0_i32 = arith.constant 0 : i32
    %c0_i32_0 = arith.constant 0 : i32
    %c0_i32_1 = arith.constant 0 : i32
    return %c0_i32, %c0_i32_0 : i32, i32
  }
  func.func @transform_2(%arg0: i32) -> (i32, i32, i32) {
    %c0_i32 = arith.constant 0 : i32
    %c0_i32_0 = arith.constant 0 : i32
    %c0_i32_1 = arith.constant 0 : i32
    return %arg0, %c0_i32, %c0_i32_0 : i32, i32, i32
  }
  func.func @transform_3(%arg0: i32) -> (i32, i32, i32) {
    %c0_i32 = arith.constant 0 : i32
    %c0_i32_0 = arith.constant 0 : i32
    %c0_i32_1 = arith.constant 0 : i32
    return %arg0, %c0_i32, %c0_i32_0 : i32, i32, i32
  }
  func.func @transform_4(%arg0: i32) -> (i32, i32, i32) {
    %c0_i32 = arith.constant 0 : i32
    %c0_i32_0 = arith.constant 0 : i32
    %c0_i32_1 = arith.constant 0 : i32
    return %arg0, %c0_i32, %c0_i32_0 : i32, i32, i32
  }
}

module attributes {stable_mosaic.version = 11 : i64} {
  func.func @_bn_residual_relu_kernel(%arg0: i32, %arg1: memref<1x4x256xf32, #tpu.memory_space<vmem>>, %arg2: memref<1x4x256xf32, #tpu.memory_space<vmem>>, %arg3: memref<4x1xf32, #tpu.memory_space<vmem>>, %arg4: memref<4x1xf32, #tpu.memory_space<vmem>>, %arg5: memref<1x4x256xf32, #tpu.memory_space<vmem>>) attributes {dimension_semantics = [#tpu.dimension_semantics<parallel>], iteration_bounds = array<i64: 2>, scalar_prefetch = 0 : i64, scratch_operands = 0 : i64, tpu.core_type = #tpu.core_type<tc>, window_params = [{transform_indices = @transform_0, window_bounds = array<i64: 1, 4, 256>}, {transform_indices = @transform_1, window_bounds = array<i64: 1, 4, 256>}, {pipeline_mode = #tpu.pipeline_mode<synchronous>, transform_indices = @transform_2, window_bounds = array<i64: 4, 1>}, {pipeline_mode = #tpu.pipeline_mode<synchronous>, transform_indices = @transform_3, window_bounds = array<i64: 4, 1>}, {transform_indices = @transform_4, window_bounds = array<i64: 1, 4, 256>}]} {
    %c0 = arith.constant 0 : index
    %c0_0 = arith.constant 0 : index
    %c0_1 = arith.constant 0 : index
    %0 = vector.load %arg2[%c0, %c0_0, %c0_1] : memref<1x4x256xf32, #tpu.memory_space<vmem>>, vector<1x4x256xf32>
    %1 = vector.shape_cast %0 : vector<1x4x256xf32> to vector<4x256xf32>
    %c0_2 = arith.constant 0 : index
    %c0_3 = arith.constant 0 : index
    %c0_4 = arith.constant 0 : index
    %2 = vector.load %arg1[%c0_2, %c0_3, %c0_4] : memref<1x4x256xf32, #tpu.memory_space<vmem>>, vector<1x4x256xf32>
    %3 = vector.shape_cast %2 : vector<1x4x256xf32> to vector<4x256xf32>
    %c0_5 = arith.constant 0 : index
    %c0_6 = arith.constant 0 : index
    %4 = vector.load %arg3[%c0_5, %c0_6] : memref<4x1xf32, #tpu.memory_space<vmem>>, vector<4x1xf32>
    %5 = vector.broadcast %4 : vector<4x1xf32> to vector<4x256xf32>
    %6 = arith.mulf %3, %5 : vector<4x256xf32>
    %c0_7 = arith.constant 0 : index
    %c0_8 = arith.constant 0 : index
    %7 = vector.load %arg4[%c0_7, %c0_8] : memref<4x1xf32, #tpu.memory_space<vmem>>, vector<4x1xf32>
    %8 = vector.broadcast %7 : vector<4x1xf32> to vector<4x256xf32>
    %9 = arith.addf %6, %8 : vector<4x256xf32>
    %10 = arith.addf %9, %1 : vector<4x256xf32>
    %cst = arith.constant 0.000000e+00 : f32
    %11 = vector.broadcast %cst : f32 to vector<4x256xf32>
    %12 = arith.maximumf %10, %11 : vector<4x256xf32>
    %c0_9 = arith.constant 0 : index
    %c0_10 = arith.constant 0 : index
    %c0_11 = arith.constant 0 : index
    %13 = vector.load %arg5[%c0_9, %c0_10, %c0_11] : memref<1x4x256xf32, #tpu.memory_space<vmem>>, vector<1x4x256xf32>
    %14 = vector.shape_cast %13 : vector<1x4x256xf32> to vector<4x256xf32>
    %15 = vector.shape_cast %12 : vector<4x256xf32> to vector<1x4x256xf32>
    tpu.vector_store %arg5[%c0_9, %c0_10, %c0_11], %15 {strides = array<i32>} : memref<1x4x256xf32, #tpu.memory_space<vmem>>, vector<1x4x256xf32>,
    return
  }
  func.func @transform_0(%arg0: i32) -> (i32, i32, i32) {
    %c0_i32 = arith.constant 0 : i32
    %c0_i32_0 = arith.constant 0 : i32
    %c0_i32_1 = arith.constant 0 : i32
    return %arg0, %c0_i32, %c0_i32_0 : i32, i32, i32
  }
  func.func @transform_1(%arg0: i32) -> (i32, i32, i32) {
    %c0_i32 = arith.constant 0 : i32
    %c0_i32_0 = arith.constant 0 : i32
    %c0_i32_1 = arith.constant 0 : i32
    return %arg0, %c0_i32, %c0_i32_0 : i32, i32, i32
  }
  func.func @transform_2(%arg0: i32) -> (i32, i32) {
    %c0_i32 = arith.constant 0 : i32
    %c0_i32_0 = arith.constant 0 : i32
    %c0_i32_1 = arith.constant 0 : i32
    return %c0_i32, %c0_i32_0 : i32, i32
  }
  func.func @transform_3(%arg0: i32) -> (i32, i32) {
    %c0_i32 = arith.constant 0 : i32
    %c0_i32_0 = arith.constant 0 : i32
    %c0_i32_1 = arith.constant 0 : i32
    return %c0_i32, %c0_i32_0 : i32, i32
  }
  func.func @transform_4(%arg0: i32) -> (i32, i32, i32) {
    %c0_i32 = arith.constant 0 : i32
    %c0_i32_0 = arith.constant 0 : i32
    %c0_i32_1 = arith.constant 0 : i32
    return %arg0, %c0_i32, %c0_i32_0 : i32, i32, i32
  }
}

module attributes {stable_mosaic.version = 11 : i64} {
  func.func @_bn_relu_conv2_stats_kernel(%arg0: i32, %arg1: memref<1x4x256xf32, #tpu.memory_space<vmem>>, %arg2: memref<4x1xf32, #tpu.memory_space<vmem>>, %arg3: memref<4x1xf32, #tpu.memory_space<vmem>>, %arg4: memref<4x36xf32, #tpu.memory_space<vmem>>, %arg5: memref<1x4x256xf32, #tpu.memory_space<vmem>>, %arg6: memref<1x4x1xf32, #tpu.memory_space<vmem>>, %arg7: memref<1x4x1xf32, #tpu.memory_space<vmem>>) attributes {dimension_semantics = [#tpu.dimension_semantics<parallel>], iteration_bounds = array<i64: 2>, scalar_prefetch = 0 : i64, scratch_operands = 0 : i64, tpu.core_type = #tpu.core_type<tc>, window_params = [{transform_indices = @transform_0, window_bounds = array<i64: 1, 4, 256>}, {pipeline_mode = #tpu.pipeline_mode<synchronous>, transform_indices = @transform_1, window_bounds = array<i64: 4, 1>}, {pipeline_mode = #tpu.pipeline_mode<synchronous>, transform_indices = @transform_2, window_bounds = array<i64: 4, 1>}, {pipeline_mode = #tpu.pipeline_mode<synchronous>, transform_indices = @transform_3, window_bounds = array<i64: 4, 36>}, {transform_indices = @transform_4, window_bounds = array<i64: 1, 4, 256>}, {transform_indices = @transform_5, window_bounds = array<i64: 1, 4, 1>}, {transform_indices = @transform_6, window_bounds = array<i64: 1, 4, 1>}]} {
    %c0 = arith.constant 0 : index
    %c0_0 = arith.constant 0 : index
    %c0_1 = arith.constant 0 : index
    %0 = vector.load %arg1[%c0, %c0_0, %c0_1] : memref<1x4x256xf32, #tpu.memory_space<vmem>>, vector<1x4x256xf32>
    %1 = vector.shape_cast %0 : vector<1x4x256xf32> to vector<4x256xf32>
    %c0_2 = arith.constant 0 : index
    %c0_3 = arith.constant 0 : index
    %2 = vector.load %arg2[%c0_2, %c0_3] : memref<4x1xf32, #tpu.memory_space<vmem>>, vector<4x1xf32>
    %3 = vector.broadcast %2 : vector<4x1xf32> to vector<4x256xf32>
    %4 = arith.mulf %1, %3 : vector<4x256xf32>
    %c0_4 = arith.constant 0 : index
    %c0_5 = arith.constant 0 : index
    %5 = vector.load %arg3[%c0_4, %c0_5] : memref<4x1xf32, #tpu.memory_space<vmem>>, vector<4x1xf32>
    %6 = vector.broadcast %5 : vector<4x1xf32> to vector<4x256xf32>
    %7 = arith.addf %4, %6 : vector<4x256xf32>
    %cst = arith.constant 0.000000e+00 : f32
    %8 = vector.broadcast %cst : f32 to vector<4x256xf32>
    %9 = arith.maximumf %7, %8 : vector<4x256xf32>
    %c0_6 = arith.constant 0 : index
    %c0_7 = arith.constant 0 : index
    %10 = vector.load %arg4[%c0_6, %c0_7] : memref<4x36xf32, #tpu.memory_space<vmem>>, vector<4x36xf32>
    %11 = tpu.iota {dimensions = array<i32: 1>} : vector<1x256xi32>
    %c16_i32 = arith.constant 16 : i32
    %c0_i32 = arith.constant 0 : i32
    %12 = arith.cmpi eq, %c16_i32, %c0_i32 : i32
    %c1_i32 = arith.constant 1 : i32
    %13 = arith.select %12, %c1_i32, %c16_i32 : i32
    %14 = vector.broadcast %13 : i32 to vector<1x256xi32>
    %15 = arith.remsi %11, %14 : vector<1x256xi32>
    %c0_i32_8 = arith.constant 0 : i32
    %16 = vector.broadcast %c0_i32_8 : i32 to vector<1x256xi32>
    %17 = arith.cmpi ne, %15, %16 : vector<1x256xi32>
    %c0_i32_9 = arith.constant 0 : i32
    %18 = vector.broadcast %c0_i32_9 : i32 to vector<1x256xi32>
    %19 = arith.cmpi slt, %15, %18 : vector<1x256xi32>
    %c0_i32_10 = arith.constant 0 : i32
    %20 = arith.cmpi slt, %13, %c0_i32_10 : i32
    %21 = vector.broadcast %20 : i1 to vector<1x256xi1>
    %22 = vector.broadcast %21 : vector<1x256xi1> to vector<1x256xi1>
    %23 = arith.xori %19, %22 : vector<1x256xi1>
    %24 = arith.andi %23, %17 : vector<1x256xi1>
    %25 = vector.broadcast %13 : i32 to vector<1x256xi32>
    %26 = arith.addi %15, %25 : vector<1x256xi32>
    %27 = arith.select %24, %26, %15 : vector<1x256xi1>, vector<1x256xi32>
    %c16_i32_11 = arith.constant 16 : i32
    %28 = vector.broadcast %c16_i32_11 : i32 to vector<1x256xi32>
    %29 = arith.cmpi sge, %11, %28 : vector<1x256xi32>
    %c240_i32 = arith.constant 240 : i32
    %30 = vector.broadcast %c240_i32 : i32 to vector<1x256xi32>
    %31 = arith.cmpi slt, %11, %30 : vector<1x256xi32>
    %c1_i32_12 = arith.constant 1 : i32
    %32 = vector.broadcast %c1_i32_12 : i32 to vector<1x256xi32>
    %33 = arith.cmpi sge, %27, %32 : vector<1x256xi32>
    %c14_i32 = arith.constant 14 : i32
    %34 = vector.broadcast %c14_i32 : i32 to vector<1x256xi32>
    %35 = arith.cmpi sle, %27, %34 : vector<1x256xi32>
    %c17_i32 = arith.constant 17 : i32
    %36 = tpu.dynamic_rotate %9 by %c17_i32 dim 1 : vector<4x256xf32>, i32 -> vector<4x256xf32>
    %37 = arith.andi %29, %33 : vector<1x256xi1>
    %cst_13 = arith.constant 0.000000e+00 : f32
    %38 = vector.shape_cast %37 : vector<1x256xi1> to vector<1x256xi1>
    %39 = vector.broadcast %38 : vector<1x256xi1> to vector<4x256xi1>
    %40 = vector.broadcast %cst_13 : f32 to vector<4x256xf32>
    %41 = arith.select %39, %36, %40 : vector<4x256xi1>, vector<4x256xf32>
    %c16_i32_14 = arith.constant 16 : i32
    %42 = tpu.dynamic_rotate %9 by %c16_i32_14 dim 1 : vector<4x256xf32>, i32 -> vector<4x256xf32>
    %cst_15 = arith.constant 0.000000e+00 : f32
    %43 = vector.shape_cast %29 : vector<1x256xi1> to vector<1x256xi1>
    %44 = vector.broadcast %43 : vector<1x256xi1> to vector<4x256xi1>
    %45 = vector.broadcast %cst_15 : f32 to vector<4x256xf32>
    %46 = arith.select %44, %42, %45 : vector<4x256xi1>, vector<4x256xf32>
    %c15_i32 = arith.constant 15 : i32
    %47 = tpu.dynamic_rotate %9 by %c15_i32 dim 1 : vector<4x256xf32>, i32 -> vector<4x256xf32>
    %48 = arith.andi %29, %35 : vector<1x256xi1>
    %cst_16 = arith.constant 0.000000e+00 : f32
    %49 = vector.shape_cast %48 : vector<1x256xi1> to vector<1x256xi1>
    %50 = vector.broadcast %49 : vector<1x256xi1> to vector<4x256xi1>
    %51 = vector.broadcast %cst_16 : f32 to vector<4x256xf32>
    %52 = arith.select %50, %47, %51 : vector<4x256xi1>, vector<4x256xf32>
    %c1_i32_17 = arith.constant 1 : i32
    %53 = tpu.dynamic_rotate %9 by %c1_i32_17 dim 1 : vector<4x256xf32>, i32 -> vector<4x256xf32>
    %cst_18 = arith.constant 0.000000e+00 : f32
    %54 = vector.shape_cast %33 : vector<1x256xi1> to vector<1x256xi1>
    %55 = vector.broadcast %54 : vector<1x256xi1> to vector<4x256xi1>
    %56 = vector.broadcast %cst_18 : f32 to vector<4x256xf32>
    %57 = arith.select %55, %53, %56 : vector<4x256xi1>, vector<4x256xf32>
    %c255_i32 = arith.constant 255 : i32
    %58 = tpu.dynamic_rotate %9 by %c255_i32 dim 1 : vector<4x256xf32>, i32 -> vector<4x256xf32>
    %cst_19 = arith.constant 0.000000e+00 : f32
    %59 = vector.shape_cast %35 : vector<1x256xi1> to vector<1x256xi1>
    %60 = vector.broadcast %59 : vector<1x256xi1> to vector<4x256xi1>
    %61 = vector.broadcast %cst_19 : f32 to vector<4x256xf32>
    %62 = arith.select %60, %58, %61 : vector<4x256xi1>, vector<4x256xf32>
    %c241_i32 = arith.constant 241 : i32
    %63 = tpu.dynamic_rotate %9 by %c241_i32 dim 1 : vector<4x256xf32>, i32 -> vector<4x256xf32>
    %64 = arith.andi %31, %33 : vector<1x256xi1>
    %cst_20 = arith.constant 0.000000e+00 : f32
    %65 = vector.shape_cast %64 : vector<1x256xi1> to vector<1x256xi1>
    %66 = vector.broadcast %65 : vector<1x256xi1> to vector<4x256xi1>
    %67 = vector.broadcast %cst_20 : f32 to vector<4x256xf32>
    %68 = arith.select %66, %63, %67 : vector<4x256xi1>, vector<4x256xf32>
    %c240_i32_21 = arith.constant 240 : i32
    %69 = tpu.dynamic_rotate %9 by %c240_i32_21 dim 1 : vector<4x256xf32>, i32 -> vector<4x256xf32>
    %cst_22 = arith.constant 0.000000e+00 : f32
    %70 = vector.shape_cast %31 : vector<1x256xi1> to vector<1x256xi1>
    %71 = vector.broadcast %70 : vector<1x256xi1> to vector<4x256xi1>
    %72 = vector.broadcast %cst_22 : f32 to vector<4x256xf32>
    %73 = arith.select %71, %69, %72 : vector<4x256xi1>, vector<4x256xf32>
    %c239_i32 = arith.constant 239 : i32
    %74 = tpu.dynamic_rotate %9 by %c239_i32 dim 1 : vector<4x256xf32>, i32 -> vector<4x256xf32>
    %75 = arith.andi %31, %35 : vector<1x256xi1>
    %cst_23 = arith.constant 0.000000e+00 : f32
    %76 = vector.shape_cast %75 : vector<1x256xi1> to vector<1x256xi1>
    %77 = vector.broadcast %76 : vector<1x256xi1> to vector<4x256xi1>
    %78 = vector.broadcast %cst_23 : f32 to vector<4x256xf32>
    %79 = arith.select %77, %74, %78 : vector<4x256xi1>, vector<4x256xf32>
    %80 = tpu.concatenate %41, %46, %52, %57, %9, %62, %68, %73, %79 in 0 : vector<4x256xf32>, vector<4x256xf32>, vector<4x256xf32>, vector<4x256xf32>, vector<4x256xf32>, vector<4x256xf32>, vector<4x256xf32>, vector<4x256xf32>, vector<4x256xf32> -> vector<36x256xf32>
    %cst_24 = arith.constant dense<0.000000e+00> : vector<4x256xf32>
    %81 = tpu.matmul %10, %80, %cst_24 {dimension_numbers = #tpu.dot_dimension_numbers<[1], [0], [0], [1], [0, 0, 1, 1], [], []>} : vector<4x36xf32>, vector<36x256xf32>, vector<4x256xf32> -> vector<4x256xf32>
    %c0_25 = arith.constant 0 : index
    %c0_26 = arith.constant 0 : index
    %c0_27 = arith.constant 0 : index
    %82 = vector.load %arg5[%c0_25, %c0_26, %c0_27] : memref<1x4x256xf32, #tpu.memory_space<vmem>>, vector<1x4x256xf32>
    %83 = vector.shape_cast %82 : vector<1x4x256xf32> to vector<4x256xf32>
    %84 = vector.shape_cast %81 : vector<4x256xf32> to vector<1x4x256xf32>
    tpu.vector_store %arg5[%c0_25, %c0_26, %c0_27], %84 {strides = array<i32>} : memref<1x4x256xf32, #tpu.memory_space<vmem>>, vector<1x4x256xf32>,
    %cst_28 = arith.constant 1.000000e+00 : f32
    %85 = vector.broadcast %cst_28 : f32 to vector<256x1xf32>
    %cst_29 = arith.constant dense<0.000000e+00> : vector<4x1xf32>
    %86 = tpu.matmul %81, %85, %cst_29 {dimension_numbers = #tpu.dot_dimension_numbers<[1], [0], [0], [1], [0, 0, 1, 1], [], []>} : vector<4x256xf32>, vector<256x1xf32>, vector<4x1xf32> -> vector<4x1xf32>
    %87 = arith.mulf %81, %81 : vector<4x256xf32>
    %cst_30 = arith.constant dense<0.000000e+00> : vector<4x1xf32>
    %88 = tpu.matmul %87, %85, %cst_30 {dimension_numbers = #tpu.dot_dimension_numbers<[1], [0], [0], [1], [0, 0, 1, 1], [], []>} : vector<4x256xf32>, vector<256x1xf32>, vector<4x1xf32> -> vector<4x1xf32>
    %c0_31 = arith.constant 0 : index
    %c0_32 = arith.constant 0 : index
    %c0_33 = arith.constant 0 : index
    %89 = vector.load %arg6[%c0_31, %c0_32, %c0_33] : memref<1x4x1xf32, #tpu.memory_space<vmem>>, vector<1x4x1xf32>
    %90 = vector.shape_cast %89 : vector<1x4x1xf32> to vector<4x1xf32>
    %91 = vector.shape_cast %86 : vector<4x1xf32> to vector<1x4x1xf32>
    tpu.vector_store %arg6[%c0_31, %c0_32, %c0_33], %91 {strides = array<i32>} : memref<1x4x1xf32, #tpu.memory_space<vmem>>, vector<1x4x1xf32>,
    %c0_34 = arith.constant 0 : index
    %c0_35 = arith.constant 0 : index
    %c0_36 = arith.constant 0 : index
    %92 = vector.load %arg7[%c0_34, %c0_35, %c0_36] : memref<1x4x1xf32, #tpu.memory_space<vmem>>, vector<1x4x1xf32>
    %93 = vector.shape_cast %92 : vector<1x4x1xf32> to vector<4x1xf32>
    %94 = vector.shape_cast %88 : vector<4x1xf32> to vector<1x4x1xf32>
    tpu.vector_store %arg7[%c0_34, %c0_35, %c0_36], %94 {strides = array<i32>} : memref<1x4x1xf32, #tpu.memory_space<vmem>>, vector<1x4x1xf32>,
    return
  }
  func.func @transform_0(%arg0: i32) -> (i32, i32, i32) {
    %c0_i32 = arith.constant 0 : i32
    %c0_i32_0 = arith.constant 0 : i32
    %c0_i32_1 = arith.constant 0 : i32
    return %arg0, %c0_i32, %c0_i32_0 : i32, i32, i32
  }
  func.func @transform_1(%arg0: i32) -> (i32, i32) {
    %c0_i32 = arith.constant 0 : i32
    %c0_i32_0 = arith.constant 0 : i32
    %c0_i32_1 = arith.constant 0 : i32
    return %c0_i32, %c0_i32_0 : i32, i32
  }
  func.func @transform_2(%arg0: i32) -> (i32, i32) {
    %c0_i32 = arith.constant 0 : i32
    %c0_i32_0 = arith.constant 0 : i32
    %c0_i32_1 = arith.constant 0 : i32
    return %c0_i32, %c0_i32_0 : i32, i32
  }
  func.func @transform_3(%arg0: i32) -> (i32, i32) {
    %c0_i32 = arith.constant 0 : i32
    %c0_i32_0 = arith.constant 0 : i32
    %c0_i32_1 = arith.constant 0 : i32
    return %c0_i32, %c0_i32_0 : i32, i32
  }
  func.func @transform_4(%arg0: i32) -> (i32, i32, i32) {
    %c0_i32 = arith.constant 0 : i32
    %c0_i32_0 = arith.constant 0 : i32
    %c0_i32_1 = arith.constant 0 : i32
    return %arg0, %c0_i32, %c0_i32_0 : i32, i32, i32
  }
  func.func @transform_5(%arg0: i32) -> (i32, i32, i32) {
    %c0_i32 = arith.constant 0 : i32
    %c0_i32_0 = arith.constant 0 : i32
    %c0_i32_1 = arith.constant 0 : i32
    return %arg0, %c0_i32, %c0_i32_0 : i32, i32, i32
  }
  func.func @transform_6(%arg0: i32) -> (i32, i32, i32) {
    %c0_i32 = arith.constant 0 : i32
    %c0_i32_0 = arith.constant 0 : i32
    %c0_i32_1 = arith.constant 0 : i32
    return %arg0, %c0_i32, %c0_i32_0 : i32, i32, i32
  }
}

</mosaic_0001>

<llo_original>
// kernel: basic_block_pallas.3
$region0: #{basic_block_pallas.3}
  #allocation0 [shape = 'u32[]', space=smem, size = 0x4, offset = 0x4, fixed_abs, tag = 'smem constant byte address 0x4 - core index']
  #allocation1 [shape = 'u32[144,128]{1,0:T(1,128)}', space=vmem, size = 0x12000, scoped, tag = 'internal scratch']
  %s0 = inlined_call_operand.vmem [shape: f32[2,4,256], index: 0, kind: input, shape index: {}]
  %s1 = inlined_call_operand.vmem [shape: f32[4,36], index: 1, kind: input, shape index: {}]
  %s2 = inlined_call_operand.vmem [shape: f32[2,4,256], index: 2, kind: output, shape index: {0}]
  %s3 = inlined_call_operand.vmem [shape: f32[2,4,1], index: 3, kind: output, shape index: {1}]
  %s4 = inlined_call_operand.vmem [shape: f32[2,4,1], index: 4, kind: output, shape index: {2}]
  %5 = xla_tuple %s2, %s3, %s4
  %s6 = sld [smem:[#allocation0]]
  $region57: #{basic_block_pallas.3} parent=0
    _
  %s8 = ssub.s32 1, %s6
  %s9 = scalar_select 0, %s8, %s6
  loop: start=0, step=1, limit=4
  $region2: #{basic_block_pallas.3} parent=0 // loop_pre_header
    _
  $region3: #{basic_block_pallas.3} parent=0 // loop_header
    %s11 = sphi 0, %s15
    %p12 = scmp.ge.s32.totalorder %s11, 4
    %s21 = sphi 0, %s23
    %s24 = sphi 0, %s21
    %s25 = sphi 0, %s24
    %s41 = sphi 0, %s25
    %s45 = sphi 0, %s45
    %s47 = sphi 0, %s45
    %s48 = sphi 0, %s47
    %s62 = sphi 0, %s48
    %s68 = sphi 0, %s70
    %s71 = sphi 0, %s68
    %s72 = sphi 0, %s71
    %s88 = sphi 0, %s72
    %s94 = sphi 0, %s96
    %s97 = sphi 0, %s94
    %s98 = sphi 0, %s97
    %s114 = sphi 0, %s98
    %s120 = sphi 0, %s122
    %s123 = sphi 0, %s120
    %s124 = sphi 0, %s123
    %s140 = sphi 0, %s124
  $region4: #{basic_block_pallas.3} parent=0 // loop_header_branch
    %14 = sbr.rel (%p12) target = $region8
  $region5: #{basic_block_pallas.3} parent=0 // loop_body
    %s16 = ssub.s32 %s11, 1
    %s17 = ssub.s32 %s11, 2
    %s18 = sadd.s32 %s11, 1
    %s19 = ssub.s32 %s11, %s18
    %p20 = scmp.eq.s32.totalorder %s19, 0
    %s22 = sadd.s32 %s21, 1
    %s23 = scalar_select %p20, %s21, %s22
    %p26 = pneg %p20
    %p27 = scmp.eq.s32.totalorder %s11, 1
    %p28 = por %p26, %p27
    %p29 = scmp.ne.s32.totalorder %s21, %s24
    %p30 = scmp.eq.s32.totalorder %s11, 0
    %p31 = por %p29, %p30
    %p32 = scmp.ne.s32.totalorder %s21, %s24
    %p33 = scmp.eq.s32.totalorder %s16, 1
    %p34 = por %p32, %p33
    %p35 = scmp.ne.s32.totalorder %s24, %s25
    %p36 = scmp.eq.s32.totalorder %s16, 0
    %p37 = por %p35, %p36
    %p38 = scmp.ne.s32.totalorder %s24, %s25
    %p39 = scmp.eq.s32.totalorder %s17, 1
    %p40 = por %p38, %p39
    %p42 = scmp.ne.s32.totalorder %s25, %s41
    %p43 = scmp.eq.s32.totalorder %s17, 0
    %p44 = por %p42, %p43
    %s46 = sadd.s32 %s45, 1
    %p49 = scmp.eq.s32.totalorder %s11, 1
    %p50 = scmp.ne.s32.totalorder %s45, %s47
    %p51 = scmp.eq.s32.totalorder %s11, 0
    %p52 = por %p50, %p51
    %p53 = scmp.ne.s32.totalorder %s45, %s47
    %p54 = scmp.eq.s32.totalorder %s16, 1
    %p55 = por %p53, %p54
    %p56 = scmp.ne.s32.totalorder %s47, %s48
    %p57 = scmp.eq.s32.totalorder %s16, 0
    %p58 = por %p56, %p57
    %p59 = scmp.ne.s32.totalorder %s47, %s48
    %p60 = scmp.eq.s32.totalorder %s17, 1
    %p61 = por %p59, %p60
    %p63 = scmp.ne.s32.totalorder %s48, %s62
    %p64 = scmp.eq.s32.totalorder %s17, 0
    %p65 = por %p63, %p64
    %s66 = ssub.s32 %s11, %s18
    %p67 = scmp.eq.s32.totalorder %s66, 0
    %s69 = sadd.s32 %s68, 1
    %s70 = scalar_select %p67, %s68, %s69
    %p73 = pneg %p67
    %p74 = scmp.eq.s32.totalorder %s11, 1
    %p75 = por %p73, %p74
    %p76 = scmp.ne.s32.totalorder %s68, %s71
    %p77 = scmp.eq.s32.totalorder %s11, 0
    %p78 = por %p76, %p77
    %p79 = scmp.ne.s32.totalorder %s68, %s71
    %p80 = scmp.eq.s32.totalorder %s16, 1
    %p81 = por %p79, %p80
    %p82 = scmp.ne.s32.totalorder %s71, %s72
    %p83 = scmp.eq.s32.totalorder %s16, 0
    %p84 = por %p82, %p83
    %p85 = scmp.ne.s32.totalorder %s71, %s72
    %p86 = scmp.eq.s32.totalorder %s17, 1
    %p87 = por %p85, %p86
    %p89 = scmp.ne.s32.totalorder %s72, %s88
    %p90 = scmp.eq.s32.totalorder %s17, 0
    %p91 = por %p89, %p90
    %s92 = ssub.s32 %s11, %s18
    %p93 = scmp.eq.s32.totalorder %s92, 0
    %s95 = sadd.s32 %s94, 1
    %s96 = scalar_select %p93, %s94, %s95
    %p99 = pneg %p93
    %p100 = scmp.eq.s32.totalorder %s11, 1
    %p101 = por %p99, %p100
    %p102 = scmp.ne.s32.totalorder %s94, %s97
    %p103 = scmp.eq.s32.totalorder %s11, 0
    %p104 = por %p102, %p103
    %p105 = scmp.ne.s32.totalorder %s94, %s97
    %p106 = scmp.eq.s32.totalorder %s16, 1
    %p107 = por %p105, %p106
    %p108 = scmp.ne.s32.totalorder %s97, %s98
    %p109 = scmp.eq.s32.totalorder %s16, 0
    %p110 = por %p108, %p109
    %p111 = scmp.ne.s32.totalorder %s97, %s98
    %p112 = scmp.eq.s32.totalorder %s17, 1
    %p113 = por %p111, %p112
    %p115 = scmp.ne.s32.totalorder %s98, %s114
    %p116 = scmp.eq.s32.totalorder %s17, 0
    %p117 = por %p115, %p116
    %s118 = ssub.s32 %s11, %s18
    %p119 = scmp.eq.s32.totalorder %s118, 0
    %s121 = sadd.s32 %s120, 1
    %s122 = scalar_select %p119, %s120, %s121
    %p125 = pneg %p119
    %p126 = scmp.eq.s32.totalorder %s11, 1
    %p127 = por %p125, %p126
    %p128 = scmp.ne.s32.totalorder %s120, %s123
    %p129 = scmp.eq.s32.totalorder %s11, 0
    %p130 = por %p128, %p129
    %p131 = scmp.ne.s32.totalorder %s120, %s123
    %p132 = scmp.eq.s32.totalorder %s16, 1
    %p133 = por %p131, %p132
    %p134 = scmp.ne.s32.totalorder %s123, %s124
    %p135 = scmp.eq.s32.totalorder %s16, 0
    %p136 = por %p134, %p135
    %p137 = scmp.ne.s32.totalorder %s123, %s124
    %p138 = scmp.eq.s32.totalorder %s17, 1
    %p139 = por %p137, %p138
    %p141 = scmp.ne.s32.totalorder %s124, %s140
    %p142 = scmp.eq.s32.totalorder %s17, 0
    %p143 = por %p141, %p142
    %p144 = scmp.le.s32.totalorder 1, %s11
    %p145 = scmp.lt.s32.totalorder %s11, 3
    %p146 = pnand %p144, %p145
    %p147 = pneg %p146
    // Predicated region
    $region9: #{basic_block_pallas.3} parent=5 // pred_check
      _
    $region10: #{basic_block_pallas.3} parent=5 // pred_check_branch
      %149 = sbr.rel (%p146) target = $region12
    $region11: #{basic_block_pallas.3} parent=5 // pred_region
      %s150 = ssub.s32 %s11, 1
      // Predicated region
      $region13: #{basic_block_pallas.3} parent=11 // pred_check
        %p151 = pneg %p58
      $region14: #{basic_block_pallas.3} parent=11 // pred_check_branch
        %153 = sbr.rel (%p151) target = $region16
      $region15: #{basic_block_pallas.3} parent=11 // pred_region
        _
      $region16: #{basic_block_pallas.3} parent=11 // pred_fallthru
        _
    $region12: #{basic_block_pallas.3} parent=5 // pred_fallthru
      _
    %p154 = scmp.lt.s32.totalorder %s11, 2
    // Predicated region
    $region17: #{basic_block_pallas.3} parent=5 // pred_check
      %p155 = pneg %p154
    $region18: #{basic_block_pallas.3} parent=5 // pred_check_branch
      %157 = sbr.rel (%p155) target = $region20
    $region19: #{basic_block_pallas.3} parent=5 // pred_region
      // Predicated region
      $region21: #{basic_block_pallas.3} parent=19 // pred_check
        %p158 = pneg %p31
      $region22: #{basic_block_pallas.3} parent=19 // pred_check_branch
        %160 = sbr.rel (%p158) target = $region24
      $region23: #{basic_block_pallas.3} parent=19 // pred_region
        %p161 = scmp.lt.s32.totalorder %s11, 1
        %s162 = scalar_select %p161, %s11, 1
        %s163 = smul.addr %s162, 2
        %s164 = smul.addr %s163, 4
        %s165 = scalar_lea.vmem %s0, %s164
      $region24: #{basic_block_pallas.3} parent=19 // pred_fallthru
        _
    $region20: #{basic_block_pallas.3} parent=5 // pred_fallthru
      _
    %p166 = scmp.le.s32.totalorder 1, %s11
    %p167 = scmp.lt.s32.totalorder %s11, 3
    %p168 = pnand %p166, %p167
    %p169 = pneg %p168
    // Predicated region
    $region25: #{basic_block_pallas.3} parent=5 // pred_check
      _
    $region26: #{basic_block_pallas.3} parent=5 // pred_check_branch
      %171 = sbr.rel (%p168) target = $region28
    $region27: #{basic_block_pallas.3} parent=5 // pred_region
      %s172 = ssub.s32 %s11, 1
      %p173 = scmp.lt.s32.totalorder %s16, 1
      %s174 = scalar_select %p173, %s16, 1
      %s175 = smul.addr %s174, 2
      %s176 = smul.addr %s175, 4
      %s177 = scalar_lea.vmem %s0, %s176
      %p178 = pneg %p37
      %p179 = pneg %p34
      %p180 = pneg %p58
      %p181 = pneg %p55
      %p182 = pneg %p84
      %p183 = pneg %p81
      %p184 = scmp.lt.s32.totalorder %s16, 1
      %s185 = scalar_select %p184, %s16, 1
      %s186 = smul.addr %s185, 2
      %s187 = smul.addr %s186, 4
      %s188 = scalar_lea.vmem %s2, %s187
      %p189 = pneg %p110
      %p190 = pneg %p107
      %p191 = scmp.lt.s32.totalorder %s16, 1
      %s192 = scalar_select %p191, %s16, 1
      %s193 = smul.addr %s192, 4
      %s194 = scalar_lea.vmem %s3, %s193
      %p195 = pneg %p136
      %p196 = pneg %p133
      %p197 = scmp.lt.s32.totalorder %s16, 1
      %s198 = scalar_select %p197, %s16, 1
      %s199 = smul.addr %s198, 4
      %s200 = scalar_lea.vmem %s4, %s199
      %p201 = scmp.lt.s32.totalorder %s16, 1
      %s202 = scalar_select %p201, %s16, 1
      %s203 = smul.addr %s202, 2
      %s204 = smul.addr %s203, 4
      %s205 = scalar_lea.vmem %s0, %s204
      %p206 = scmp.lt.s32.totalorder %s16, 1
      %s207 = scalar_select %p206, %s16, 1
      %s208 = smul.addr %s207, 2
      %s209 = smul.addr %s208, 4
      %s210 = scalar_lea.vmem %s2, %s209
      %p211 = scmp.lt.s32.totalorder %s16, 1
      %s212 = scalar_select %p211, %s16, 1
      %s213 = smul.addr %s212, 4
      %s214 = scalar_lea.vmem %s3, %s213
      %p215 = scmp.lt.s32.totalorder %s16, 1
      %s216 = scalar_select %p215, %s16, 1
      %s217 = smul.addr %s216, 4
      %s218 = scalar_lea.vmem %s4, %s217
      %v219 = vld [vmem:[%s205] sm:$0xff]
      %v220 = vld [vmem:[%s1] sm:$0xf]
      %v221 = vlaneseq
      %v222 = vand.u32 %v221, 127
      %v223 = vadd.s32 %v222, 128
      %vm224 = vcmp.lt.s32.totalorder %v222, 0
      %v225 = vsub.s32 0, %v222
      %v226 = vsel %vm224, %v225, %v222
      %v227 = vshrl.u32 %v226, 4
      %v228 = vand.u32 %v226, 15
      %v229 = vsub.s32 0, %v228
      %v230 = vsel %vm224, %v229, %v228
      %vm231 = vcmp.lt.s32.totalorder %v223, 0
      %v232 = vsub.s32 0, %v223
      %v233 = vsel %vm231, %v232, %v223
      %v234 = vshrl.u32 %v233, 4
      %v235 = vand.u32 %v233, 15
      %v236 = vsub.s32 0, %v235
      %v237 = vsel %vm231, %v236, %v235
      %vm238 = vcmp.ne.s32.totalorder %v230, 0
      %vm239 = vcmp.ne.s32.totalorder %v237, 0
      %vm240 = vcmp.lt.s32.totalorder %v230, 0
      %vm241 = vcmp.lt.s32.totalorder %v237, 0
      %vm242 = vmand %vm240, %vm238
      %vm243 = vmand %vm241, %vm239
      %v244 = vadd.s32 %v230, 16
      %v245 = vadd.s32 %v237, 16
      %v246 = vsel %vm242, %v244, %v230
      %v247 = vsel %vm243, %v245, %v237
      %vm248 = vcmp.ge.s32.totalorder %v222, 16
      %vm249 = vcmp.ge.s32.totalorder %v223, 16
      %vm250 = vcmp.lt.s32.totalorder %v222, 240
      %vm251 = vcmp.lt.s32.totalorder %v223, 240
      %vm252 = vcmp.ge.s32.totalorder %v246, 1
      %vm253 = vcmp.ge.s32.totalorder %v247, 1
      %vm254 = vcmp.le.s32.totalorder %v246, 14
      %vm255 = vcmp.le.s32.totalorder %v247, 14
      %v257 = vcombine.high %v219, %v219
      %259 = vrot.lane.b32.xlu0 %v219, 17
      %v260 = vpop.permute.xlu0 %259
      %261 = vrot.lane.b32.xlu0 %v257, 17
      %v262 = vpop.permute.xlu0 %261
      %vm263 = vcmp.lt.s32.totalorder %v222, 17
      %v264 = vsel %vm263, %v260, %v262
      %v265 = vsel %vm263, %v262, %v260
      %vm266 = vmand %vm248, %vm252
      %vm267 = vmand %vm249, %vm253
      %v268 = vsel %vm266, 1, 0
      %v269 = vsel %vm267, 1, 0
      %vm270 = vcmp.eq.s32.totalorder %v268, 1
      %vm271 = vcmp.eq.s32.totalorder %v269, 1
      %v272 = vsel %vm270, %v265, 0.0
      %v273 = vsel %vm271, %v264, 0.0
      %274 = vrot.lane.b32.xlu0 %v219, 16
      %v275 = vpop.permute.xlu0 %274
      %276 = vrot.lane.b32.xlu0 %v257, 16
      %v277 = vpop.permute.xlu0 %276
      %vm278 = vcmp.lt.s32.totalorder %v222, 16
      %v279 = vsel %vm278, %v275, %v277
      %v280 = vsel %vm278, %v277, %v275
      %v281 = vsel %vm248, 1, 0
      %v282 = vsel %vm249, 1, 0
      %vm283 = vcmp.eq.s32.totalorder %v281, 1
      %vm284 = vcmp.eq.s32.totalorder %v282, 1
      %v285 = vsel %vm283, %v280, 0.0
      %v286 = vsel %vm284, %v279, 0.0
      %287 = vrot.lane.b32.xlu0 %v219, 15
      %v288 = vpop.permute.xlu0 %287
      %289 = vrot.lane.b32.xlu0 %v257, 15
      %v290 = vpop.permute.xlu0 %289
      %vm291 = vcmp.lt.s32.totalorder %v222, 15
      %v292 = vsel %vm291, %v288, %v290
      %v293 = vsel %vm291, %v290, %v288
      %vm294 = vmand %vm248, %vm254
      %vm295 = vmand %vm249, %vm255
      %v296 = vsel %vm294, 1, 0
      %v297 = vsel %vm295, 1, 0
      %vm298 = vcmp.eq.s32.totalorder %v296, 1
      %vm299 = vcmp.eq.s32.totalorder %v297, 1
      %v300 = vsel %vm298, %v293, 0.0
      %v301 = vsel %vm299, %v292, 0.0
      %302 = vrot.lane.b32.xlu0 %v219, 1
      %v303 = vpop.permute.xlu0 %302
      %304 = vrot.lane.b32.xlu0 %v257, 1
      %v305 = vpop.permute.xlu0 %304
      %vm306 = vcmp.lt.s32.totalorder %v222, 1
      %v307 = vsel %vm306, %v303, %v305
      %v308 = vsel %vm306, %v305, %v303
      %v309 = vsel %vm252, 1, 0
      %v310 = vsel %vm253, 1, 0
      %vm311 = vcmp.eq.s32.totalorder %v309, 1
      %vm312 = vcmp.eq.s32.totalorder %v310, 1
      %v313 = vsel %vm311, %v308, 0.0
      %v314 = vsel %vm312, %v307, 0.0
      %315 = vrot.lane.b32.xlu0 %v219, 127
      %v316 = vpop.permute.xlu0 %315
      %317 = vrot.lane.b32.xlu0 %v257, 127
      %v318 = vpop.permute.xlu0 %317
      %vm319 = vcmp.lt.s32.totalorder %v222, 127
      %v320 = vsel %vm319, %v316, %v318
      %v321 = vsel %vm319, %v318, %v316
      %v322 = vsel %vm254, 1, 0
      %v323 = vsel %vm255, 1, 0
      %vm324 = vcmp.eq.s32.totalorder %v322, 1
      %vm325 = vcmp.eq.s32.totalorder %v323, 1
      %v326 = vsel %vm324, %v320, 0.0
      %v327 = vsel %vm325, %v321, 0.0
      %328 = vrot.lane.b32.xlu0 %v219, 113
      %v329 = vpop.permute.xlu0 %328
      %330 = vrot.lane.b32.xlu0 %v257, 113
      %v331 = vpop.permute.xlu0 %330
      %vm332 = vcmp.lt.s32.totalorder %v222, 113
      %v333 = vsel %vm332, %v329, %v331
      %v334 = vsel %vm332, %v331, %v329
      %vm335 = vmand %vm250, %vm252
      %vm336 = vmand %vm251, %vm253
      %v337 = vsel %vm335, 1, 0
      %v338 = vsel %vm336, 1, 0
      %vm339 = vcmp.eq.s32.totalorder %v337, 1
      %vm340 = vcmp.eq.s32.totalorder %v338, 1
      %v341 = vsel %vm339, %v333, 0.0
      %v342 = vsel %vm340, %v334, 0.0
      %343 = vrot.lane.b32.xlu0 %v219, 112
      %v344 = vpop.permute.xlu0 %343
      %345 = vrot.lane.b32.xlu0 %v257, 112
      %v346 = vpop.permute.xlu0 %345
      %vm347 = vcmp.lt.s32.totalorder %v222, 112
      %v348 = vsel %vm347, %v344, %v346
      %v349 = vsel %vm347, %v346, %v344
      %v350 = vsel %vm250, 1, 0
      %v351 = vsel %vm251, 1, 0
      %vm352 = vcmp.eq.s32.totalorder %v350, 1
      %vm353 = vcmp.eq.s32.totalorder %v351, 1
      %v354 = vsel %vm352, %v348, 0.0
      %v355 = vsel %vm353, %v349, 0.0
      %356 = vrot.lane.b32.xlu0 %v219, 111
      %v357 = vpop.permute.xlu0 %356
      %358 = vrot.lane.b32.xlu0 %v257, 111
      %v359 = vpop.permute.xlu0 %358
      %vm360 = vcmp.lt.s32.totalorder %v222, 111
      %v361 = vsel %vm360, %v357, %v359
      %v362 = vsel %vm360, %v359, %v357
      %vm363 = vmand %vm250, %vm254
      %vm364 = vmand %vm251, %vm255
      %v365 = vsel %vm363, 1, 0
      %v366 = vsel %vm364, 1, 0
      %vm367 = vcmp.eq.s32.totalorder %v365, 1
      %vm368 = vcmp.eq.s32.totalorder %v366, 1
      %v369 = vsel %vm367, %v361, 0.0
      %v370 = vsel %vm368, %v362, 0.0
      %v373 = vrot.slane %v285, 4
      %v374 = vrot.slane %v286, 4
      %v379 = vrot.slane %v313, 4
      %v380 = vrot.slane %v314, 4
      %v385 = vrot.slane %v326, 4
      %v386 = vrot.slane %v327, 4
      %v391 = vrot.slane %v354, 4
      %v392 = vrot.slane %v355, 4
      %vm395 = vcmask 1043456
      %v396 = vsel %vm395, %v272, %v373
      %v397 = vsel %vm395, %v273, %v374
      %v398 = vsel %vm395, %v300, %v379
      %v399 = vsel %vm395, %v301, %v380
      %v400 = vsel %vm395, %v219, %v385
      %v401 = vsel %vm395, %v257, %v386
      %v402 = vsel %vm395, %v341, %v391
      %v403 = vsel %vm395, %v342, %v392
      %vm404 = vcmask 293888
      %v406 = vsel %vm404, %v220, 0
      %v409 = vsel %vm395, %v369, 0
      %v412 = vsel %vm395, %v370, 0
      %414 = vmatprep.subr.mxu0 %v397
      %415 = vmatpush1.msra.mxu0 %v396
      %416 = vmatprep.subr.mxu0 %v399
      %417 = vmatpush1.msra.mxu0 %v398
      %418 = vmatprep.subr.mxu0 %v401
      %419 = vmatpush1.msra.mxu0 %v400
      %420 = vmatprep.subr.mxu0 %v403
      %421 = vmatpush1.msra.mxu0 %v402
      %422 = vmatprep.subr.mxu0 %v412
      %423 = vmatpush1.msra.mxu0 %v409
      %424 = vmatprep.subr.mxu0 0.0
      %425 = vmatpush1.msra.mxu0 0.0
      %426 = vmatprep.subr.mxu0 0.0
      %427 = vmatpush1.msra.mxu0 0.0
      %428 = vmatprep.subr.mxu0 0.0
      %429 = vmatpush1.msra.mxu0 0.0
      %430 = vmatprep.subr.mxu0 0.0
      %431 = vmatpush1.msra.mxu0 0.0
      %432 = vmatprep.subr.mxu0 0.0
      %433 = vmatpush1.msra.mxu0 0.0
      %434 = vmatprep.subr.mxu0 0.0
      %435 = vmatpush1.msra.mxu0 0.0
      %436 = vmatprep.subr.mxu0 0.0
      %437 = vmatpush1.msra.mxu0 0.0
      %438 = vmatprep.subr.mxu0 0.0
      %439 = vmatpush1.msra.mxu0 0.0
      %440 = vmatprep.subr.mxu0 0.0
      %441 = vmatpush1.msra.mxu0 0.0
      %442 = vmatprep.subr.mxu0 0.0
      %443 = vmatpush1.msra.mxu0 0.0
      %444 = vmatprep.subr.mxu0 0.0
      %445 = vmatpush1.msra.mxu0 0.0
      %446 = vmatprep.subr.mxu0 0.0
      %447 = vmatpush1.msra.mxu0 0.0
      %448 = vmatprep.subr.mxu0 0.0
      %449 = vmatpush1.msra.mxu0 0.0
      %450 = vmatprep.subr.mxu0 0.0
      %451 = vmatpush1.msra.mxu0 0.0
      %452 = vmatprep.subr.mxu0 0.0
      %453 = vmatpush1.msra.mxu0 0.0
      %454 = vmatprep.subr.mxu0 0.0
      %455 = vmatpush1.msra.mxu0 0.0
      %456 = vmatprep.subr.mxu0 0.0
      %457 = vmatpush1.msra.mxu0 0.0
      %458 = vmatprep.subr.mxu0 0.0
      %459 = vmatpush1.msra.mxu0 0.0
      %460 = vmatprep.subr.mxu0 0.0
      %461 = vmatpush1.msra.mxu0 0.0
      %462 = vmatprep.subr.mxu0 0.0
      %463 = vmatpush1.msra.mxu0 0.0
      %464 = vmatprep.subr.mxu0 0.0
      %465 = vmatpush1.msra.mxu0 0.0
      %466 = vmatprep.subr.mxu0 0.0
      %467 = vmatpush1.msra.mxu0 0.0
      %468 = vmatprep.subr.mxu0 0.0
      %469 = vmatpush1.msra.mxu0 0.0
      %470 = vmatprep.subr.mxu0 0.0
      %471 = vmatpush1.msra.mxu0 0.0
      %472 = vmatprep.subr.mxu0 0.0
      %473 = vmatpush1.msra.mxu0 0.0
      %474 = vmatprep.subr.mxu0 0.0
      %475 = vmatpush1.msra.mxu0 0.0
      %476 = vmatprep.subr.mxu0 0.0
      %477 = vmatpush1.msra.mxu0 0.0
      %478 = vmatprep.mubr.f32.mxu0 0.0
      %479 = vmatmul.mubr.f32.gmra.mrb[0].mxu0 %v406
      %v480 = vpop.f32.mrb[0].mxu0
      %v481 = vadd.f32 0.0, %v480
      %v482 = vpop.f32.mrb[0].mxu0
      %v483 = vadd.f32 0.0, %v482
      %484 = vdwg.mxu0
      %v487 = vcombine.low %v481, %v483
      %489 = vst [vmem:[%s210] sm:$0xff] %v487
      %490 = vmatprep.subr.mxu0 0.0
      %491 = vmatpush1.msra.mxu0 1.0
      %492 = vmatprep.subr.mxu0 0.0
      %493 = vmatpush1.msra.mxu0 1.0
      %494 = vmatprep.subr.mxu0 0.0
      %495 = vmatpush1.msra.mxu0 1.0
      %496 = vmatprep.subr.mxu0 0.0
      %497 = vmatpush1.msra.mxu0 1.0
      %498 = vmatprep.subr.mxu0 0.0
      %499 = vmatpush1.msra.mxu0 1.0
      %500 = vmatprep.subr.mxu0 0.0
      %501 = vmatpush1.msra.mxu0 1.0
      %502 = vmatprep.subr.mxu0 0.0
      %503 = vmatpush1.msra.mxu0 1.0
      %504 = vmatprep.subr.mxu0 0.0
      %505 = vmatpush1.msra.mxu0 1.0
      %506 = vmatprep.subr.mxu0 0.0
      %507 = vmatpush1.msra.mxu0 1.0
      %508 = vmatprep.subr.mxu0 0.0
      %509 = vmatpush1.msra.mxu0 1.0
      %510 = vmatprep.subr.mxu0 0.0
      %511 = vmatpush1.msra.mxu0 1.0
      %512 = vmatprep.subr.mxu0 0.0
      %513 = vmatpush1.msra.mxu0 1.0
      %514 = vmatprep.subr.mxu0 0.0
      %515 = vmatpush1.msra.mxu0 1.0
      %516 = vmatprep.subr.mxu0 0.0
      %517 = vmatpush1.msra.mxu0 1.0
      %518 = vmatprep.subr.mxu0 0.0
      %519 = vmatpush1.msra.mxu0 1.0
      %520 = vmatprep.subr.mxu0 0.0
      %521 = vmatpush1.msra.mxu0 1.0
      %522 = vmatprep.subr.mxu0 0.0
      %523 = vmatpush1.msra.mxu0 1.0
      %524 = vmatprep.subr.mxu0 0.0
      %525 = vmatpush1.msra.mxu0 1.0
      %526 = vmatprep.subr.mxu0 0.0
      %527 = vmatpush1.msra.mxu0 1.0
      %528 = vmatprep.subr.mxu0 0.0
      %529 = vmatpush1.msra.mxu0 1.0
      %530 = vmatprep.subr.mxu0 0.0
      %531 = vmatpush1.msra.mxu0 1.0
      %532 = vmatprep.subr.mxu0 0.0
      %533 = vmatpush1.msra.mxu0 1.0
      %534 = vmatprep.subr.mxu0 0.0
      %535 = vmatpush1.msra.mxu0 1.0
      %536 = vmatprep.subr.mxu0 0.0
      %537 = vmatpush1.msra.mxu0 1.0
      %538 = vmatprep.subr.mxu0 0.0
      %539 = vmatpush1.msra.mxu0 1.0
      %540 = vmatprep.subr.mxu0 0.0
      %541 = vmatpush1.msra.mxu0 1.0
      %542 = vmatprep.subr.mxu0 0.0
      %543 = vmatpush1.msra.mxu0 1.0
      %544 = vmatprep.subr.mxu0 0.0
      %545 = vmatpush1.msra.mxu0 1.0
      %546 = vmatprep.subr.mxu0 0.0
      %547 = vmatpush1.msra.mxu0 1.0
      %548 = vmatprep.subr.mxu0 0.0
      %549 = vmatpush1.msra.mxu0 1.0
      %550 = vmatprep.subr.mxu0 0.0
      %551 = vmatpush1.msra.mxu0 1.0
      %552 = vmatprep.subr.mxu0 0.0
      %553 = vmatpush1.msra.mxu0 1.0
      %554 = vmatprep.mubr.f32.mxu0 %v483
      %555 = vmatmul.mubr.f32.gmra.mrb[0].mxu0 %v481
      %v556 = vpop.f32.mrb[0].mxu0
      %v557 = vadd.f32 0.0, %v556
      %v558 = vpop.f32.mrb[0].mxu0
      %559 = vdwg.mxu0
      %v560 = vmul.f32 %v481, %v481
      %v561 = vmul.f32 %v483, %v483
      %562 = vmatprep.subr.mxu0 0.0
      %563 = vmatpush1.msra.mxu0 1.0
      %564 = vmatprep.subr.mxu0 0.0
      %565 = vmatpush1.msra.mxu0 1.0
      %566 = vmatprep.subr.mxu0 0.0
      %567 = vmatpush1.msra.mxu0 1.0
      %568 = vmatprep.subr.mxu0 0.0
      %569 = vmatpush1.msra.mxu0 1.0
      %570 = vmatprep.subr.mxu0 0.0
      %571 = vmatpush1.msra.mxu0 1.0
      %572 = vmatprep.subr.mxu0 0.0
      %573 = vmatpush1.msra.mxu0 1.0
      %574 = vmatprep.subr.mxu0 0.0
      %575 = vmatpush1.msra.mxu0 1.0
      %576 = vmatprep.subr.mxu0 0.0
      %577 = vmatpush1.msra.mxu0 1.0
      %578 = vmatprep.subr.mxu0 0.0
      %579 = vmatpush1.msra.mxu0 1.0
      %580 = vmatprep.subr.mxu0 0.0
      %581 = vmatpush1.msra.mxu0 1.0
      %582 = vmatprep.subr.mxu0 0.0
      %583 = vmatpush1.msra.mxu0 1.0
      %584 = vmatprep.subr.mxu0 0.0
      %585 = vmatpush1.msra.mxu0 1.0
      %586 = vmatprep.subr.mxu0 0.0
      %587 = vmatpush1.msra.mxu0 1.0
      %588 = vmatprep.subr.mxu0 0.0
      %589 = vmatpush1.msra.mxu0 1.0
      %590 = vmatprep.subr.mxu0 0.0
      %591 = vmatpush1.msra.mxu0 1.0
      %592 = vmatprep.subr.mxu0 0.0
      %593 = vmatpush1.msra.mxu0 1.0
      %594 = vmatprep.subr.mxu0 0.0
      %595 = vmatpush1.msra.mxu0 1.0
      %596 = vmatprep.subr.mxu0 0.0
      %597 = vmatpush1.msra.mxu0 1.0
      %598 = vmatprep.subr.mxu0 0.0
      %599 = vmatpush1.msra.mxu0 1.0
      %600 = vmatprep.subr.mxu0 0.0
      %601 = vmatpush1.msra.mxu0 1.0
      %602 = vmatprep.subr.mxu0 0.0
      %603 = vmatpush1.msra.mxu0 1.0
      %604 = vmatprep.subr.mxu0 0.0
      %605 = vmatpush1.msra.mxu0 1.0
      %606 = vmatprep.subr.mxu0 0.0
      %607 = vmatpush1.msra.mxu0 1.0
      %608 = vmatprep.subr.mxu0 0.0
      %609 = vmatpush1.msra.mxu0 1.0
      %610 = vmatprep.subr.mxu0 0.0
      %611 = vmatpush1.msra.mxu0 1.0
      %612 = vmatprep.subr.mxu0 0.0
      %613 = vmatpush1.msra.mxu0 1.0
      %614 = vmatprep.subr.mxu0 0.0
      %615 = vmatpush1.msra.mxu0 1.0
      %616 = vmatprep.subr.mxu0 0.0
      %617 = vmatpush1.msra.mxu0 1.0
      %618 = vmatprep.subr.mxu0 0.0
      %619 = vmatpush1.msra.mxu0 1.0
      %620 = vmatprep.subr.mxu0 0.0
      %621 = vmatpush1.msra.mxu0 1.0
      %622 = vmatprep.subr.mxu0 0.0
      %623 = vmatpush1.msra.mxu0 1.0
      %624 = vmatprep.subr.mxu0 0.0
      %625 = vmatpush1.msra.mxu0 1.0
      %626 = vmatprep.mubr.f32.mxu0 %v561
      %627 = vmatmul.mubr.f32.gmra.mrb[0].mxu0 %v560
      %v628 = vpop.f32.mrb[0].mxu0
      %v629 = vadd.f32 0.0, %v628
      %v630 = vpop.f32.mrb[0].mxu0
      %631 = vdwg.mxu0
      %vm632 = vcmask 3072
      %633 = vst.msk [vmem:[%s214] sm:$0xf] %vm632, %v557
      %634 = vst.msk [vmem:[%s218] sm:$0xf] %vm632, %v629
      %p635 = scmp.lt.s32.totalorder %s16, 1
      %s636 = scalar_select %p635, %s16, 1
      %s637 = smul.addr %s636, 2
      %s638 = smul.addr %s637, 4
      %s639 = scalar_lea.vmem %s2, %s638
      %p640 = scmp.lt.s32.totalorder %s16, 1
      %s641 = scalar_select %p640, %s16, 1
      %s642 = smul.addr %s641, 4
      %s643 = scalar_lea.vmem %s3, %s642
      %p644 = scmp.lt.s32.totalorder %s16, 1
      %s645 = scalar_select %p644, %s16, 1
      %s646 = smul.addr %s645, 4
      %s647 = scalar_lea.vmem %s4, %s646
      // Predicated region
      $region29: #{basic_block_pallas.3} parent=27 // pred_check
        %p648 = pneg %p81
      $region30: #{basic_block_pallas.3} parent=27 // pred_check_branch
        %650 = sbr.rel (%p648) target = $region32
      $region31: #{basic_block_pallas.3} parent=27 // pred_region
        _
      $region32: #{basic_block_pallas.3} parent=27 // pred_fallthru
        _
      // Predicated region
      $region33: #{basic_block_pallas.3} parent=27 // pred_check
        %p651 = pneg %p107
      $region34: #{basic_block_pallas.3} parent=27 // pred_check_branch
        %653 = sbr.rel (%p651) target = $region36
      $region35: #{basic_block_pallas.3} parent=27 // pred_region
        _
      $region36: #{basic_block_pallas.3} parent=27 // pred_fallthru
        _
      // Predicated region
      $region37: #{basic_block_pallas.3} parent=27 // pred_check
        %p654 = pneg %p133
      $region38: #{basic_block_pallas.3} parent=27 // pred_check_branch
        %656 = sbr.rel (%p654) target = $region40
      $region39: #{basic_block_pallas.3} parent=27 // pred_region
        _
      $region40: #{basic_block_pallas.3} parent=27 // pred_fallthru
        _
    $region28: #{basic_block_pallas.3} parent=5 // pred_fallthru
      _
    %p657 = scmp.le.s32.totalorder 2, %s11
    // Predicated region
    $region41: #{basic_block_pallas.3} parent=5 // pred_check
      %p658 = pneg %p657
    $region42: #{basic_block_pallas.3} parent=5 // pred_check_branch
      %660 = sbr.rel (%p658) target = $region44
    $region43: #{basic_block_pallas.3} parent=5 // pred_region
      %s661 = ssub.s32 %s11, 2
      // Predicated region
      $region45: #{basic_block_pallas.3} parent=43 // pred_check
        %p662 = pneg %p87
      $region46: #{basic_block_pallas.3} parent=43 // pred_check_branch
        %664 = sbr.rel (%p662) target = $region48
      $region47: #{basic_block_pallas.3} parent=43 // pred_region
        %p665 = scmp.lt.s32.totalorder %s17, 1
        %s666 = scalar_select %p665, %s17, 1
        %s667 = smul.addr %s666, 2
        %s668 = smul.addr %s667, 4
        %s669 = scalar_lea.vmem %s2, %s668
      $region48: #{basic_block_pallas.3} parent=43 // pred_fallthru
        _
      // Predicated region
      $region49: #{basic_block_pallas.3} parent=43 // pred_check
        %p670 = pneg %p113
      $region50: #{basic_block_pallas.3} parent=43 // pred_check_branch
        %672 = sbr.rel (%p670) target = $region52
      $region51: #{basic_block_pallas.3} parent=43 // pred_region
        %p673 = scmp.lt.s32.totalorder %s17, 1
        %s674 = scalar_select %p673, %s17, 1
        %s675 = smul.addr %s674, 4
        %s676 = scalar_lea.vmem %s3, %s675
      $region52: #{basic_block_pallas.3} parent=43 // pred_fallthru
        _
      // Predicated region
      $region53: #{basic_block_pallas.3} parent=43 // pred_check
        %p677 = pneg %p139
      $region54: #{basic_block_pallas.3} parent=43 // pred_check_branch
        %679 = sbr.rel (%p677) target = $region56
      $region55: #{basic_block_pallas.3} parent=43 // pred_region
        %p680 = scmp.lt.s32.totalorder %s17, 1
        %s681 = scalar_select %p680, %s17, 1
        %s682 = smul.addr %s681, 4
        %s683 = scalar_lea.vmem %s4, %s682
      $region56: #{basic_block_pallas.3} parent=43 // pred_fallthru
        _
    $region44: #{basic_block_pallas.3} parent=5 // pred_fallthru
      _
  $region6: #{basic_block_pallas.3} parent=0 // loop_footer
    %s15 = sadd.s32 1, %s11
  $region7: #{basic_block_pallas.3} parent=0 // loop_footer_branch
    %10 = sbr.rel target = $region3
  $region8: #{basic_block_pallas.3} parent=0 // loop_exit
    _

// kernel: basic_block_pallas.5
$region0: #{basic_block_pallas.5}
  #allocation0 [shape = 'u32[]', space=smem, size = 0x4, offset = 0x4, fixed_abs, tag = 'smem constant byte address 0x4 - core index']
  #allocation1 [shape = 'u32[144,128]{1,0:T(1,128)}', space=vmem, size = 0x12000, scoped, tag = 'internal scratch']
  %s0 = inlined_call_operand.vmem [shape: f32[2,4,256], index: 0, kind: input, shape index: {}]
  %s1 = inlined_call_operand.vmem [shape: f32[2,4,256], index: 1, kind: input, shape index: {}]
  %s2 = inlined_call_operand.vmem [shape: f32[4,1], index: 2, kind: input, shape index: {}]
  %s3 = inlined_call_operand.vmem [shape: f32[4,1], index: 3, kind: input, shape index: {}]
  %s4 = inlined_call_operand.vmem [shape: f32[2,4,256], index: 4, kind: output, shape index: {}]
  %s5 = sld [smem:[#allocation0]]
  $region49: #{basic_block_pallas.5} parent=0
    _
  %s7 = ssub.s32 1, %s5
  %s8 = scalar_select 0, %s7, %s5
  loop: start=0, step=1, limit=4
  $region2: #{basic_block_pallas.5} parent=0 // loop_pre_header
    _
  $region3: #{basic_block_pallas.5} parent=0 // loop_header
    %s10 = sphi 0, %s14
    %p11 = scmp.ge.s32.totalorder %s10, 4
    %s20 = sphi 0, %s22
    %s23 = sphi 0, %s20
    %s24 = sphi 0, %s23
    %s40 = sphi 0, %s24
    %s46 = sphi 0, %s48
    %s49 = sphi 0, %s46
    %s50 = sphi 0, %s49
    %s66 = sphi 0, %s50
    %s70 = sphi 0, %s70
    %s72 = sphi 0, %s70
    %s73 = sphi 0, %s72
    %s87 = sphi 0, %s73
    %s91 = sphi 0, %s91
    %s93 = sphi 0, %s91
    %s94 = sphi 0, %s93
    %s108 = sphi 0, %s94
    %s114 = sphi 0, %s116
    %s117 = sphi 0, %s114
    %s118 = sphi 0, %s117
    %s134 = sphi 0, %s118
  $region4: #{basic_block_pallas.5} parent=0 // loop_header_branch
    %13 = sbr.rel (%p11) target = $region8
  $region5: #{basic_block_pallas.5} parent=0 // loop_body
    %s15 = ssub.s32 %s10, 1
    %s16 = ssub.s32 %s10, 2
    %s17 = sadd.s32 %s10, 1
    %s18 = ssub.s32 %s10, %s17
    %p19 = scmp.eq.s32.totalorder %s18, 0
    %s21 = sadd.s32 %s20, 1
    %s22 = scalar_select %p19, %s20, %s21
    %p25 = pneg %p19
    %p26 = scmp.eq.s32.totalorder %s10, 1
    %p27 = por %p25, %p26
    %p28 = scmp.ne.s32.totalorder %s20, %s23
    %p29 = scmp.eq.s32.totalorder %s10, 0
    %p30 = por %p28, %p29
    %p31 = scmp.ne.s32.totalorder %s20, %s23
    %p32 = scmp.eq.s32.totalorder %s15, 1
    %p33 = por %p31, %p32
    %p34 = scmp.ne.s32.totalorder %s23, %s24
    %p35 = scmp.eq.s32.totalorder %s15, 0
    %p36 = por %p34, %p35
    %p37 = scmp.ne.s32.totalorder %s23, %s24
    %p38 = scmp.eq.s32.totalorder %s16, 1
    %p39 = por %p37, %p38
    %p41 = scmp.ne.s32.totalorder %s24, %s40
    %p42 = scmp.eq.s32.totalorder %s16, 0
    %p43 = por %p41, %p42
    %s44 = ssub.s32 %s10, %s17
    %p45 = scmp.eq.s32.totalorder %s44, 0
    %s47 = sadd.s32 %s46, 1
    %s48 = scalar_select %p45, %s46, %s47
    %p51 = pneg %p45
    %p52 = scmp.eq.s32.totalorder %s10, 1
    %p53 = por %p51, %p52
    %p54 = scmp.ne.s32.totalorder %s46, %s49
    %p55 = scmp.eq.s32.totalorder %s10, 0
    %p56 = por %p54, %p55
    %p57 = scmp.ne.s32.totalorder %s46, %s49
    %p58 = scmp.eq.s32.totalorder %s15, 1
    %p59 = por %p57, %p58
    %p60 = scmp.ne.s32.totalorder %s49, %s50
    %p61 = scmp.eq.s32.totalorder %s15, 0
    %p62 = por %p60, %p61
    %p63 = scmp.ne.s32.totalorder %s49, %s50
    %p64 = scmp.eq.s32.totalorder %s16, 1
    %p65 = por %p63, %p64
    %p67 = scmp.ne.s32.totalorder %s50, %s66
    %p68 = scmp.eq.s32.totalorder %s16, 0
    %p69 = por %p67, %p68
    %s71 = sadd.s32 %s70, 1
    %p74 = scmp.eq.s32.totalorder %s10, 1
    %p75 = scmp.ne.s32.totalorder %s70, %s72
    %p76 = scmp.eq.s32.totalorder %s10, 0
    %p77 = por %p75, %p76
    %p78 = scmp.ne.s32.totalorder %s70, %s72
    %p79 = scmp.eq.s32.totalorder %s15, 1
    %p80 = por %p78, %p79
    %p81 = scmp.ne.s32.totalorder %s72, %s73
    %p82 = scmp.eq.s32.totalorder %s15, 0
    %p83 = por %p81, %p82
    %p84 = scmp.ne.s32.totalorder %s72, %s73
    %p85 = scmp.eq.s32.totalorder %s16, 1
    %p86 = por %p84, %p85
    %p88 = scmp.ne.s32.totalorder %s73, %s87
    %p89 = scmp.eq.s32.totalorder %s16, 0
    %p90 = por %p88, %p89
    %s92 = sadd.s32 %s91, 1
    %p95 = scmp.eq.s32.totalorder %s10, 1
    %p96 = scmp.ne.s32.totalorder %s91, %s93
    %p97 = scmp.eq.s32.totalorder %s10, 0
    %p98 = por %p96, %p97
    %p99 = scmp.ne.s32.totalorder %s91, %s93
    %p100 = scmp.eq.s32.totalorder %s15, 1
    %p101 = por %p99, %p100
    %p102 = scmp.ne.s32.totalorder %s93, %s94
    %p103 = scmp.eq.s32.totalorder %s15, 0
    %p104 = por %p102, %p103
    %p105 = scmp.ne.s32.totalorder %s93, %s94
    %p106 = scmp.eq.s32.totalorder %s16, 1
    %p107 = por %p105, %p106
    %p109 = scmp.ne.s32.totalorder %s94, %s108
    %p110 = scmp.eq.s32.totalorder %s16, 0
    %p111 = por %p109, %p110
    %s112 = ssub.s32 %s10, %s17
    %p113 = scmp.eq.s32.totalorder %s112, 0
    %s115 = sadd.s32 %s114, 1
    %s116 = scalar_select %p113, %s114, %s115
    %p119 = pneg %p113
    %p120 = scmp.eq.s32.totalorder %s10, 1
    %p121 = por %p119, %p120
    %p122 = scmp.ne.s32.totalorder %s114, %s117
    %p123 = scmp.eq.s32.totalorder %s10, 0
    %p124 = por %p122, %p123
    %p125 = scmp.ne.s32.totalorder %s114, %s117
    %p126 = scmp.eq.s32.totalorder %s15, 1
    %p127 = por %p125, %p126
    %p128 = scmp.ne.s32.totalorder %s117, %s118
    %p129 = scmp.eq.s32.totalorder %s15, 0
    %p130 = por %p128, %p129
    %p131 = scmp.ne.s32.totalorder %s117, %s118
    %p132 = scmp.eq.s32.totalorder %s16, 1
    %p133 = por %p131, %p132
    %p135 = scmp.ne.s32.totalorder %s118, %s134
    %p136 = scmp.eq.s32.totalorder %s16, 0
    %p137 = por %p135, %p136
    %p138 = scmp.le.s32.totalorder 1, %s10
    %p139 = scmp.lt.s32.totalorder %s10, 3
    %p140 = pnand %p138, %p139
    %p141 = pneg %p140
    // Predicated region
    $region9: #{basic_block_pallas.5} parent=5 // pred_check
      _
    $region10: #{basic_block_pallas.5} parent=5 // pred_check_branch
      %143 = sbr.rel (%p140) target = $region12
    $region11: #{basic_block_pallas.5} parent=5 // pred_region
      %s144 = ssub.s32 %s10, 1
      // Predicated region
      $region13: #{basic_block_pallas.5} parent=11 // pred_check
        %p145 = pneg %p83
      $region14: #{basic_block_pallas.5} parent=11 // pred_check_branch
        %147 = sbr.rel (%p145) target = $region16
      $region15: #{basic_block_pallas.5} parent=11 // pred_region
        _
      $region16: #{basic_block_pallas.5} parent=11 // pred_fallthru
        _
      // Predicated region
      $region17: #{basic_block_pallas.5} parent=11 // pred_check
        %p148 = pneg %p104
      $region18: #{basic_block_pallas.5} parent=11 // pred_check_branch
        %150 = sbr.rel (%p148) target = $region20
      $region19: #{basic_block_pallas.5} parent=11 // pred_region
        _
      $region20: #{basic_block_pallas.5} parent=11 // pred_fallthru
        _
    $region12: #{basic_block_pallas.5} parent=5 // pred_fallthru
      _
    %p151 = scmp.lt.s32.totalorder %s10, 2
    // Predicated region
    $region21: #{basic_block_pallas.5} parent=5 // pred_check
      %p152 = pneg %p151
    $region22: #{basic_block_pallas.5} parent=5 // pred_check_branch
      %154 = sbr.rel (%p152) target = $region24
    $region23: #{basic_block_pallas.5} parent=5 // pred_region
      // Predicated region
      $region25: #{basic_block_pallas.5} parent=23 // pred_check
        %p155 = pneg %p30
      $region26: #{basic_block_pallas.5} parent=23 // pred_check_branch
        %157 = sbr.rel (%p155) target = $region28
      $region27: #{basic_block_pallas.5} parent=23 // pred_region
        %p158 = scmp.lt.s32.totalorder %s10, 1
        %s159 = scalar_select %p158, %s10, 1
        %s160 = smul.addr %s159, 2
        %s161 = smul.addr %s160, 4
        %s162 = scalar_lea.vmem %s0, %s161
      $region28: #{basic_block_pallas.5} parent=23 // pred_fallthru
        _
      // Predicated region
      $region29: #{basic_block_pallas.5} parent=23 // pred_check
        %p163 = pneg %p56
      $region30: #{basic_block_pallas.5} parent=23 // pred_check_branch
        %165 = sbr.rel (%p163) target = $region32
      $region31: #{basic_block_pallas.5} parent=23 // pred_region
        %p166 = scmp.lt.s32.totalorder %s10, 1
        %s167 = scalar_select %p166, %s10, 1
        %s168 = smul.addr %s167, 2
        %s169 = smul.addr %s168, 4
        %s170 = scalar_lea.vmem %s1, %s169
      $region32: #{basic_block_pallas.5} parent=23 // pred_fallthru
        _
    $region24: #{basic_block_pallas.5} parent=5 // pred_fallthru
      _
    %p171 = scmp.le.s32.totalorder 1, %s10
    %p172 = scmp.lt.s32.totalorder %s10, 3
    %p173 = pnand %p171, %p172
    %p174 = pneg %p173
    // Predicated region
    $region33: #{basic_block_pallas.5} parent=5 // pred_check
      _
    $region34: #{basic_block_pallas.5} parent=5 // pred_check_branch
      %176 = sbr.rel (%p173) target = $region36
    $region35: #{basic_block_pallas.5} parent=5 // pred_region
      %s177 = ssub.s32 %s10, 1
      %p178 = scmp.lt.s32.totalorder %s15, 1
      %s179 = scalar_select %p178, %s15, 1
      %s180 = smul.addr %s179, 2
      %s181 = smul.addr %s180, 4
      %s182 = scalar_lea.vmem %s0, %s181
      %p183 = pneg %p36
      %p184 = pneg %p33
      %p185 = scmp.lt.s32.totalorder %s15, 1
      %s186 = scalar_select %p185, %s15, 1
      %s187 = smul.addr %s186, 2
      %s188 = smul.addr %s187, 4
      %s189 = scalar_lea.vmem %s1, %s188
      %p190 = pneg %p62
      %p191 = pneg %p59
      %p192 = pneg %p83
      %p193 = pneg %p80
      %p194 = pneg %p104
      %p195 = pneg %p101
      %p196 = pneg %p130
      %p197 = pneg %p127
      %p198 = scmp.lt.s32.totalorder %s15, 1
      %s199 = scalar_select %p198, %s15, 1
      %s200 = smul.addr %s199, 2
      %s201 = smul.addr %s200, 4
      %s202 = scalar_lea.vmem %s4, %s201
      %p203 = scmp.lt.s32.totalorder %s15, 1
      %s204 = scalar_select %p203, %s15, 1
      %s205 = smul.addr %s204, 2
      %s206 = smul.addr %s205, 4
      %s207 = scalar_lea.vmem %s0, %s206
      %p208 = scmp.lt.s32.totalorder %s15, 1
      %s209 = scalar_select %p208, %s15, 1
      %s210 = smul.addr %s209, 2
      %s211 = smul.addr %s210, 4
      %s212 = scalar_lea.vmem %s1, %s211
      %p213 = scmp.lt.s32.totalorder %s15, 1
      %s214 = scalar_select %p213, %s15, 1
      %s215 = smul.addr %s214, 2
      %s216 = smul.addr %s215, 4
      %s217 = scalar_lea.vmem %s4, %s216
      %v218 = vld [vmem:[%s212] sm:$0xff]
      %v219 = vld [vmem:[%s207] sm:$0xff]
      %v220 = vld [vmem:[%s2] sm:$0xf]
      %222 = vset.pattern.permute.xlu0 0
      %223 = vperm.xlu0 %222, %v220
      %v224 = vpop.permute.xlu0 %223
      %v226 = vunpack.c.l.s4 839922192
      %v227 = vunpack.c.0.s8 %v226
      %v228 = vlaneseq
      %v229 = vshrl.u32 %v228, 7
      %v230 = vsub.s32 %v227, %v229
      %v231 = vrot.slane %v224, %v230
      %v233 = vmul.f32 %v219, %v231
      %v234 = vld [vmem:[%s3] sm:$0xf]
      %236 = vset.pattern.permute.xlu0 0
      %237 = vperm.xlu0 %236, %v234
      %v238 = vpop.permute.xlu0 %237
      %v240 = vunpack.c.l.s4 839922192
      %v241 = vunpack.c.0.s8 %v240
      %v242 = vlaneseq
      %v243 = vshrl.u32 %v242, 7
      %v244 = vsub.s32 %v241, %v243
      %v245 = vrot.slane %v238, %v244
      %v247 = vadd.f32 %v233, %v245
      %v248 = vadd.f32 %v247, %v218
      %v249 = vmax.f32 %v248, 0.0
      %250 = vst [vmem:[%s217] sm:$0xff] %v249
      %p251 = scmp.lt.s32.totalorder %s15, 1
      %s252 = scalar_select %p251, %s15, 1
      %s253 = smul.addr %s252, 2
      %s254 = smul.addr %s253, 4
      %s255 = scalar_lea.vmem %s4, %s254
      // Predicated region
      $region37: #{basic_block_pallas.5} parent=35 // pred_check
        %p256 = pneg %p127
      $region38: #{basic_block_pallas.5} parent=35 // pred_check_branch
        %258 = sbr.rel (%p256) target = $region40
      $region39: #{basic_block_pallas.5} parent=35 // pred_region
        _
      $region40: #{basic_block_pallas.5} parent=35 // pred_fallthru
        _
    $region36: #{basic_block_pallas.5} parent=5 // pred_fallthru
      _
    %p259 = scmp.le.s32.totalorder 2, %s10
    // Predicated region
    $region41: #{basic_block_pallas.5} parent=5 // pred_check
      %p260 = pneg %p259
    $region42: #{basic_block_pallas.5} parent=5 // pred_check_branch
      %262 = sbr.rel (%p260) target = $region44
    $region43: #{basic_block_pallas.5} parent=5 // pred_region
      %s263 = ssub.s32 %s10, 2
      // Predicated region
      $region45: #{basic_block_pallas.5} parent=43 // pred_check
        %p264 = pneg %p133
      $region46: #{basic_block_pallas.5} parent=43 // pred_check_branch
        %266 = sbr.rel (%p264) target = $region48
      $region47: #{basic_block_pallas.5} parent=43 // pred_region
        %p267 = scmp.lt.s32.totalorder %s16, 1
        %s268 = scalar_select %p267, %s16, 1
        %s269 = smul.addr %s268, 2
        %s270 = smul.addr %s269, 4
        %s271 = scalar_lea.vmem %s4, %s270
      $region48: #{basic_block_pallas.5} parent=43 // pred_fallthru
        _
    $region44: #{basic_block_pallas.5} parent=5 // pred_fallthru
      _
  $region6: #{basic_block_pallas.5} parent=0 // loop_footer
    %s14 = sadd.s32 1, %s10
  $region7: #{basic_block_pallas.5} parent=0 // loop_footer_branch
    %9 = sbr.rel target = $region3
  $region8: #{basic_block_pallas.5} parent=0 // loop_exit
    _

// kernel: basic_block_pallas.4
$region0: #{basic_block_pallas.4}
  #allocation0 [shape = 'u32[]', space=smem, size = 0x4, offset = 0x4, fixed_abs, tag = 'smem constant byte address 0x4 - core index']
  #allocation1 [shape = 'u32[144,128]{1,0:T(1,128)}', space=vmem, size = 0x12000, scoped, tag = 'internal scratch']
  %s0 = inlined_call_operand.vmem [shape: f32[2,4,256], index: 0, kind: input, shape index: {}]
  %s1 = inlined_call_operand.vmem [shape: f32[4,1], index: 1, kind: input, shape index: {}]
  %s2 = inlined_call_operand.vmem [shape: f32[4,1], index: 2, kind: input, shape index: {}]
  %s3 = inlined_call_operand.vmem [shape: f32[4,36], index: 3, kind: input, shape index: {}]
  %s4 = inlined_call_operand.vmem [shape: f32[2,4,256], index: 4, kind: output, shape index: {0}]
  %s5 = inlined_call_operand.vmem [shape: f32[2,4,1], index: 5, kind: output, shape index: {1}]
  %s6 = inlined_call_operand.vmem [shape: f32[2,4,1], index: 6, kind: output, shape index: {2}]
  %7 = xla_tuple %s4, %s5, %s6
  %s8 = sld [smem:[#allocation0]]
  $region65: #{basic_block_pallas.4} parent=0
    _
  %s10 = ssub.s32 1, %s8
  %s11 = scalar_select 0, %s10, %s8
  loop: start=0, step=1, limit=4
  $region2: #{basic_block_pallas.4} parent=0 // loop_pre_header
    _
  $region3: #{basic_block_pallas.4} parent=0 // loop_header
    %s13 = sphi 0, %s17
    %p14 = scmp.ge.s32.totalorder %s13, 4
    %s23 = sphi 0, %s25
    %s26 = sphi 0, %s23
    %s27 = sphi 0, %s26
    %s43 = sphi 0, %s27
    %s47 = sphi 0, %s47
    %s49 = sphi 0, %s47
    %s50 = sphi 0, %s49
    %s64 = sphi 0, %s50
    %s68 = sphi 0, %s68
    %s70 = sphi 0, %s68
    %s71 = sphi 0, %s70
    %s85 = sphi 0, %s71
    %s89 = sphi 0, %s89
    %s91 = sphi 0, %s89
    %s92 = sphi 0, %s91
    %s106 = sphi 0, %s92
    %s112 = sphi 0, %s114
    %s115 = sphi 0, %s112
    %s116 = sphi 0, %s115
    %s132 = sphi 0, %s116
    %s138 = sphi 0, %s140
    %s141 = sphi 0, %s138
    %s142 = sphi 0, %s141
    %s158 = sphi 0, %s142
    %s164 = sphi 0, %s166
    %s167 = sphi 0, %s164
    %s168 = sphi 0, %s167
    %s184 = sphi 0, %s168
  $region4: #{basic_block_pallas.4} parent=0 // loop_header_branch
    %16 = sbr.rel (%p14) target = $region8
  $region5: #{basic_block_pallas.4} parent=0 // loop_body
    %s18 = ssub.s32 %s13, 1
    %s19 = ssub.s32 %s13, 2
    %s20 = sadd.s32 %s13, 1
    %s21 = ssub.s32 %s13, %s20
    %p22 = scmp.eq.s32.totalorder %s21, 0
    %s24 = sadd.s32 %s23, 1
    %s25 = scalar_select %p22, %s23, %s24
    %p28 = pneg %p22
    %p29 = scmp.eq.s32.totalorder %s13, 1
    %p30 = por %p28, %p29
    %p31 = scmp.ne.s32.totalorder %s23, %s26
    %p32 = scmp.eq.s32.totalorder %s13, 0
    %p33 = por %p31, %p32
    %p34 = scmp.ne.s32.totalorder %s23, %s26
    %p35 = scmp.eq.s32.totalorder %s18, 1
    %p36 = por %p34, %p35
    %p37 = scmp.ne.s32.totalorder %s26, %s27
    %p38 = scmp.eq.s32.totalorder %s18, 0
    %p39 = por %p37, %p38
    %p40 = scmp.ne.s32.totalorder %s26, %s27
    %p41 = scmp.eq.s32.totalorder %s19, 1
    %p42 = por %p40, %p41
    %p44 = scmp.ne.s32.totalorder %s27, %s43
    %p45 = scmp.eq.s32.totalorder %s19, 0
    %p46 = por %p44, %p45
    %s48 = sadd.s32 %s47, 1
    %p51 = scmp.eq.s32.totalorder %s13, 1
    %p52 = scmp.ne.s32.totalorder %s47, %s49
    %p53 = scmp.eq.s32.totalorder %s13, 0
    %p54 = por %p52, %p53
    %p55 = scmp.ne.s32.totalorder %s47, %s49
    %p56 = scmp.eq.s32.totalorder %s18, 1
    %p57 = por %p55, %p56
    %p58 = scmp.ne.s32.totalorder %s49, %s50
    %p59 = scmp.eq.s32.totalorder %s18, 0
    %p60 = por %p58, %p59
    %p61 = scmp.ne.s32.totalorder %s49, %s50
    %p62 = scmp.eq.s32.totalorder %s19, 1
    %p63 = por %p61, %p62
    %p65 = scmp.ne.s32.totalorder %s50, %s64
    %p66 = scmp.eq.s32.totalorder %s19, 0
    %p67 = por %p65, %p66
    %s69 = sadd.s32 %s68, 1
    %p72 = scmp.eq.s32.totalorder %s13, 1
    %p73 = scmp.ne.s32.totalorder %s68, %s70
    %p74 = scmp.eq.s32.totalorder %s13, 0
    %p75 = por %p73, %p74
    %p76 = scmp.ne.s32.totalorder %s68, %s70
    %p77 = scmp.eq.s32.totalorder %s18, 1
    %p78 = por %p76, %p77
    %p79 = scmp.ne.s32.totalorder %s70, %s71
    %p80 = scmp.eq.s32.totalorder %s18, 0
    %p81 = por %p79, %p80
    %p82 = scmp.ne.s32.totalorder %s70, %s71
    %p83 = scmp.eq.s32.totalorder %s19, 1
    %p84 = por %p82, %p83
    %p86 = scmp.ne.s32.totalorder %s71, %s85
    %p87 = scmp.eq.s32.totalorder %s19, 0
    %p88 = por %p86, %p87
    %s90 = sadd.s32 %s89, 1
    %p93 = scmp.eq.s32.totalorder %s13, 1
    %p94 = scmp.ne.s32.totalorder %s89, %s91
    %p95 = scmp.eq.s32.totalorder %s13, 0
    %p96 = por %p94, %p95
    %p97 = scmp.ne.s32.totalorder %s89, %s91
    %p98 = scmp.eq.s32.totalorder %s18, 1
    %p99 = por %p97, %p98
    %p100 = scmp.ne.s32.totalorder %s91, %s92
    %p101 = scmp.eq.s32.totalorder %s18, 0
    %p102 = por %p100, %p101
    %p103 = scmp.ne.s32.totalorder %s91, %s92
    %p104 = scmp.eq.s32.totalorder %s19, 1
    %p105 = por %p103, %p104
    %p107 = scmp.ne.s32.totalorder %s92, %s106
    %p108 = scmp.eq.s32.totalorder %s19, 0
    %p109 = por %p107, %p108
    %s110 = ssub.s32 %s13, %s20
    %p111 = scmp.eq.s32.totalorder %s110, 0
    %s113 = sadd.s32 %s112, 1
    %s114 = scalar_select %p111, %s112, %s113
    %p117 = pneg %p111
    %p118 = scmp.eq.s32.totalorder %s13, 1
    %p119 = por %p117, %p118
    %p120 = scmp.ne.s32.totalorder %s112, %s115
    %p121 = scmp.eq.s32.totalorder %s13, 0
    %p122 = por %p120, %p121
    %p123 = scmp.ne.s32.totalorder %s112, %s115
    %p124 = scmp.eq.s32.totalorder %s18, 1
    %p125 = por %p123, %p124
    %p126 = scmp.ne.s32.totalorder %s115, %s116
    %p127 = scmp.eq.s32.totalorder %s18, 0
    %p128 = por %p126, %p127
    %p129 = scmp.ne.s32.totalorder %s115, %s116
    %p130 = scmp.eq.s32.totalorder %s19, 1
    %p131 = por %p129, %p130
    %p133 = scmp.ne.s32.totalorder %s116, %s132
    %p134 = scmp.eq.s32.totalorder %s19, 0
    %p135 = por %p133, %p134
    %s136 = ssub.s32 %s13, %s20
    %p137 = scmp.eq.s32.totalorder %s136, 0
    %s139 = sadd.s32 %s138, 1
    %s140 = scalar_select %p137, %s138, %s139
    %p143 = pneg %p137
    %p144 = scmp.eq.s32.totalorder %s13, 1
    %p145 = por %p143, %p144
    %p146 = scmp.ne.s32.totalorder %s138, %s141
    %p147 = scmp.eq.s32.totalorder %s13, 0
    %p148 = por %p146, %p147
    %p149 = scmp.ne.s32.totalorder %s138, %s141
    %p150 = scmp.eq.s32.totalorder %s18, 1
    %p151 = por %p149, %p150
    %p152 = scmp.ne.s32.totalorder %s141, %s142
    %p153 = scmp.eq.s32.totalorder %s18, 0
    %p154 = por %p152, %p153
    %p155 = scmp.ne.s32.totalorder %s141, %s142
    %p156 = scmp.eq.s32.totalorder %s19, 1
    %p157 = por %p155, %p156
    %p159 = scmp.ne.s32.totalorder %s142, %s158
    %p160 = scmp.eq.s32.totalorder %s19, 0
    %p161 = por %p159, %p160
    %s162 = ssub.s32 %s13, %s20
    %p163 = scmp.eq.s32.totalorder %s162, 0
    %s165 = sadd.s32 %s164, 1
    %s166 = scalar_select %p163, %s164, %s165
    %p169 = pneg %p163
    %p170 = scmp.eq.s32.totalorder %s13, 1
    %p171 = por %p169, %p170
    %p172 = scmp.ne.s32.totalorder %s164, %s167
    %p173 = scmp.eq.s32.totalorder %s13, 0
    %p174 = por %p172, %p173
    %p175 = scmp.ne.s32.totalorder %s164, %s167
    %p176 = scmp.eq.s32.totalorder %s18, 1
    %p177 = por %p175, %p176
    %p178 = scmp.ne.s32.totalorder %s167, %s168
    %p179 = scmp.eq.s32.totalorder %s18, 0
    %p180 = por %p178, %p179
    %p181 = scmp.ne.s32.totalorder %s167, %s168
    %p182 = scmp.eq.s32.totalorder %s19, 1
    %p183 = por %p181, %p182
    %p185 = scmp.ne.s32.totalorder %s168, %s184
    %p186 = scmp.eq.s32.totalorder %s19, 0
    %p187 = por %p185, %p186
    %p188 = scmp.le.s32.totalorder 1, %s13
    %p189 = scmp.lt.s32.totalorder %s13, 3
    %p190 = pnand %p188, %p189
    %p191 = pneg %p190
    // Predicated region
    $region9: #{basic_block_pallas.4} parent=5 // pred_check
      _
    $region10: #{basic_block_pallas.4} parent=5 // pred_check_branch
      %193 = sbr.rel (%p190) target = $region12
    $region11: #{basic_block_pallas.4} parent=5 // pred_region
      %s194 = ssub.s32 %s13, 1
      // Predicated region
      $region13: #{basic_block_pallas.4} parent=11 // pred_check
        %p195 = pneg %p60
      $region14: #{basic_block_pallas.4} parent=11 // pred_check_branch
        %197 = sbr.rel (%p195) target = $region16
      $region15: #{basic_block_pallas.4} parent=11 // pred_region
        _
      $region16: #{basic_block_pallas.4} parent=11 // pred_fallthru
        _
      // Predicated region
      $region17: #{basic_block_pallas.4} parent=11 // pred_check
        %p198 = pneg %p81
      $region18: #{basic_block_pallas.4} parent=11 // pred_check_branch
        %200 = sbr.rel (%p198) target = $region20
      $region19: #{basic_block_pallas.4} parent=11 // pred_region
        _
      $region20: #{basic_block_pallas.4} parent=11 // pred_fallthru
        _
      // Predicated region
      $region21: #{basic_block_pallas.4} parent=11 // pred_check
        %p201 = pneg %p102
      $region22: #{basic_block_pallas.4} parent=11 // pred_check_branch
        %203 = sbr.rel (%p201) target = $region24
      $region23: #{basic_block_pallas.4} parent=11 // pred_region
        _
      $region24: #{basic_block_pallas.4} parent=11 // pred_fallthru
        _
    $region12: #{basic_block_pallas.4} parent=5 // pred_fallthru
      _
    %p204 = scmp.lt.s32.totalorder %s13, 2
    // Predicated region
    $region25: #{basic_block_pallas.4} parent=5 // pred_check
      %p205 = pneg %p204
    $region26: #{basic_block_pallas.4} parent=5 // pred_check_branch
      %207 = sbr.rel (%p205) target = $region28
    $region27: #{basic_block_pallas.4} parent=5 // pred_region
      // Predicated region
      $region29: #{basic_block_pallas.4} parent=27 // pred_check
        %p208 = pneg %p33
      $region30: #{basic_block_pallas.4} parent=27 // pred_check_branch
        %210 = sbr.rel (%p208) target = $region32
      $region31: #{basic_block_pallas.4} parent=27 // pred_region
        %p211 = scmp.lt.s32.totalorder %s13, 1
        %s212 = scalar_select %p211, %s13, 1
        %s213 = smul.addr %s212, 2
        %s214 = smul.addr %s213, 4
        %s215 = scalar_lea.vmem %s0, %s214
      $region32: #{basic_block_pallas.4} parent=27 // pred_fallthru
        _
    $region28: #{basic_block_pallas.4} parent=5 // pred_fallthru
      _
    %p216 = scmp.le.s32.totalorder 1, %s13
    %p217 = scmp.lt.s32.totalorder %s13, 3
    %p218 = pnand %p216, %p217
    %p219 = pneg %p218
    // Predicated region
    $region33: #{basic_block_pallas.4} parent=5 // pred_check
      _
    $region34: #{basic_block_pallas.4} parent=5 // pred_check_branch
      %221 = sbr.rel (%p218) target = $region36
    $region35: #{basic_block_pallas.4} parent=5 // pred_region
      %s222 = ssub.s32 %s13, 1
      %p223 = scmp.lt.s32.totalorder %s18, 1
      %s224 = scalar_select %p223, %s18, 1
      %s225 = smul.addr %s224, 2
      %s226 = smul.addr %s225, 4
      %s227 = scalar_lea.vmem %s0, %s226
      %p228 = pneg %p39
      %p229 = pneg %p36
      %p230 = pneg %p60
      %p231 = pneg %p57
      %p232 = pneg %p81
      %p233 = pneg %p78
      %p234 = pneg %p102
      %p235 = pneg %p99
      %p236 = pneg %p128
      %p237 = pneg %p125
      %p238 = scmp.lt.s32.totalorder %s18, 1
      %s239 = scalar_select %p238, %s18, 1
      %s240 = smul.addr %s239, 2
      %s241 = smul.addr %s240, 4
      %s242 = scalar_lea.vmem %s4, %s241
      %p243 = pneg %p154
      %p244 = pneg %p151
      %p245 = scmp.lt.s32.totalorder %s18, 1
      %s246 = scalar_select %p245, %s18, 1
      %s247 = smul.addr %s246, 4
      %s248 = scalar_lea.vmem %s5, %s247
      %p249 = pneg %p180
      %p250 = pneg %p177
      %p251 = scmp.lt.s32.totalorder %s18, 1
      %s252 = scalar_select %p251, %s18, 1
      %s253 = smul.addr %s252, 4
      %s254 = scalar_lea.vmem %s6, %s253
      %p255 = scmp.lt.s32.totalorder %s18, 1
      %s256 = scalar_select %p255, %s18, 1
      %s257 = smul.addr %s256, 2
      %s258 = smul.addr %s257, 4
      %s259 = scalar_lea.vmem %s0, %s258
      %p260 = scmp.lt.s32.totalorder %s18, 1
      %s261 = scalar_select %p260, %s18, 1
      %s262 = smul.addr %s261, 2
      %s263 = smul.addr %s262, 4
      %s264 = scalar_lea.vmem %s4, %s263
      %p265 = scmp.lt.s32.totalorder %s18, 1
      %s266 = scalar_select %p265, %s18, 1
      %s267 = smul.addr %s266, 4
      %s268 = scalar_lea.vmem %s5, %s267
      %p269 = scmp.lt.s32.totalorder %s18, 1
      %s270 = scalar_select %p269, %s18, 1
      %s271 = smul.addr %s270, 4
      %s272 = scalar_lea.vmem %s6, %s271
      %v273 = vld [vmem:[%s259] sm:$0xff]
      %v274 = vld [vmem:[%s1] sm:$0xf]
      %276 = vset.pattern.permute.xlu0 0
      %277 = vperm.xlu0 %276, %v274
      %v278 = vpop.permute.xlu0 %277
      %v280 = vunpack.c.l.s4 839922192
      %v281 = vunpack.c.0.s8 %v280
      %v282 = vlaneseq
      %v283 = vshrl.u32 %v282, 7
      %v284 = vsub.s32 %v281, %v283
      %v285 = vrot.slane %v278, %v284
      %v287 = vmul.f32 %v273, %v285
      %v288 = vld [vmem:[%s2] sm:$0xf]
      %290 = vset.pattern.permute.xlu0 0
      %291 = vperm.xlu0 %290, %v288
      %v292 = vpop.permute.xlu0 %291
      %v294 = vunpack.c.l.s4 839922192
      %v295 = vunpack.c.0.s8 %v294
      %v296 = vlaneseq
      %v297 = vshrl.u32 %v296, 7
      %v298 = vsub.s32 %v295, %v297
      %v299 = vrot.slane %v292, %v298
      %v301 = vadd.f32 %v287, %v299
      %v302 = vmax.f32 %v301, 0.0
      %v303 = vld [vmem:[%s3] sm:$0xf]
      %v304 = vlaneseq
      %v305 = vand.u32 %v304, 127
      %v306 = vadd.s32 %v305, 128
      %vm307 = vcmp.lt.s32.totalorder %v305, 0
      %v308 = vsub.s32 0, %v305
      %v309 = vsel %vm307, %v308, %v305
      %v310 = vshrl.u32 %v309, 4
      %v311 = vand.u32 %v309, 15
      %v312 = vsub.s32 0, %v311
      %v313 = vsel %vm307, %v312, %v311
      %vm314 = vcmp.lt.s32.totalorder %v306, 0
      %v315 = vsub.s32 0, %v306
      %v316 = vsel %vm314, %v315, %v306
      %v317 = vshrl.u32 %v316, 4
      %v318 = vand.u32 %v316, 15
      %v319 = vsub.s32 0, %v318
      %v320 = vsel %vm314, %v319, %v318
      %vm321 = vcmp.ne.s32.totalorder %v313, 0
      %vm322 = vcmp.ne.s32.totalorder %v320, 0
      %vm323 = vcmp.lt.s32.totalorder %v313, 0
      %vm324 = vcmp.lt.s32.totalorder %v320, 0
      %vm325 = vmand %vm323, %vm321
      %vm326 = vmand %vm324, %vm322
      %v327 = vadd.s32 %v313, 16
      %v328 = vadd.s32 %v320, 16
      %v329 = vsel %vm325, %v327, %v313
      %v330 = vsel %vm326, %v328, %v320
      %vm331 = vcmp.ge.s32.totalorder %v305, 16
      %vm332 = vcmp.ge.s32.totalorder %v306, 16
      %vm333 = vcmp.lt.s32.totalorder %v305, 240
      %vm334 = vcmp.lt.s32.totalorder %v306, 240
      %vm335 = vcmp.ge.s32.totalorder %v329, 1
      %vm336 = vcmp.ge.s32.totalorder %v330, 1
      %vm337 = vcmp.le.s32.totalorder %v329, 14
      %vm338 = vcmp.le.s32.totalorder %v330, 14
      %v340 = vcombine.high %v302, %v302
      %342 = vrot.lane.b32.xlu0 %v302, 17
      %v343 = vpop.permute.xlu0 %342
      %344 = vrot.lane.b32.xlu0 %v340, 17
      %v345 = vpop.permute.xlu0 %344
      %vm346 = vcmp.lt.s32.totalorder %v305, 17
      %v347 = vsel %vm346, %v343, %v345
      %v348 = vsel %vm346, %v345, %v343
      %vm349 = vmand %vm331, %vm335
      %vm350 = vmand %vm332, %vm336
      %v351 = vsel %vm349, 1, 0
      %v352 = vsel %vm350, 1, 0
      %vm353 = vcmp.eq.s32.totalorder %v351, 1
      %vm354 = vcmp.eq.s32.totalorder %v352, 1
      %v355 = vsel %vm353, %v348, 0.0
      %v356 = vsel %vm354, %v347, 0.0
      %357 = vrot.lane.b32.xlu0 %v302, 16
      %v358 = vpop.permute.xlu0 %357
      %359 = vrot.lane.b32.xlu0 %v340, 16
      %v360 = vpop.permute.xlu0 %359
      %vm361 = vcmp.lt.s32.totalorder %v305, 16
      %v362 = vsel %vm361, %v358, %v360
      %v363 = vsel %vm361, %v360, %v358
      %v364 = vsel %vm331, 1, 0
      %v365 = vsel %vm332, 1, 0
      %vm366 = vcmp.eq.s32.totalorder %v364, 1
      %vm367 = vcmp.eq.s32.totalorder %v365, 1
      %v368 = vsel %vm366, %v363, 0.0
      %v369 = vsel %vm367, %v362, 0.0
      %370 = vrot.lane.b32.xlu0 %v302, 15
      %v371 = vpop.permute.xlu0 %370
      %372 = vrot.lane.b32.xlu0 %v340, 15
      %v373 = vpop.permute.xlu0 %372
      %vm374 = vcmp.lt.s32.totalorder %v305, 15
      %v375 = vsel %vm374, %v371, %v373
      %v376 = vsel %vm374, %v373, %v371
      %vm377 = vmand %vm331, %vm337
      %vm378 = vmand %vm332, %vm338
      %v379 = vsel %vm377, 1, 0
      %v380 = vsel %vm378, 1, 0
      %vm381 = vcmp.eq.s32.totalorder %v379, 1
      %vm382 = vcmp.eq.s32.totalorder %v380, 1
      %v383 = vsel %vm381, %v376, 0.0
      %v384 = vsel %vm382, %v375, 0.0
      %385 = vrot.lane.b32.xlu0 %v302, 1
      %v386 = vpop.permute.xlu0 %385
      %387 = vrot.lane.b32.xlu0 %v340, 1
      %v388 = vpop.permute.xlu0 %387
      %vm389 = vcmp.lt.s32.totalorder %v305, 1
      %v390 = vsel %vm389, %v386, %v388
      %v391 = vsel %vm389, %v388, %v386
      %v392 = vsel %vm335, 1, 0
      %v393 = vsel %vm336, 1, 0
      %vm394 = vcmp.eq.s32.totalorder %v392, 1
      %vm395 = vcmp.eq.s32.totalorder %v393, 1
      %v396 = vsel %vm394, %v391, 0.0
      %v397 = vsel %vm395, %v390, 0.0
      %398 = vrot.lane.b32.xlu0 %v302, 127
      %v399 = vpop.permute.xlu0 %398
      %400 = vrot.lane.b32.xlu0 %v340, 127
      %v401 = vpop.permute.xlu0 %400
      %vm402 = vcmp.lt.s32.totalorder %v305, 127
      %v403 = vsel %vm402, %v399, %v401
      %v404 = vsel %vm402, %v401, %v399
      %v405 = vsel %vm337, 1, 0
      %v406 = vsel %vm338, 1, 0
      %vm407 = vcmp.eq.s32.totalorder %v405, 1
      %vm408 = vcmp.eq.s32.totalorder %v406, 1
      %v409 = vsel %vm407, %v403, 0.0
      %v410 = vsel %vm408, %v404, 0.0
      %411 = vrot.lane.b32.xlu0 %v302, 113
      %v412 = vpop.permute.xlu0 %411
      %413 = vrot.lane.b32.xlu0 %v340, 113
      %v414 = vpop.permute.xlu0 %413
      %vm415 = vcmp.lt.s32.totalorder %v305, 113
      %v416 = vsel %vm415, %v412, %v414
      %v417 = vsel %vm415, %v414, %v412
      %vm418 = vmand %vm333, %vm335
      %vm419 = vmand %vm334, %vm336
      %v420 = vsel %vm418, 1, 0
      %v421 = vsel %vm419, 1, 0
      %vm422 = vcmp.eq.s32.totalorder %v420, 1
      %vm423 = vcmp.eq.s32.totalorder %v421, 1
      %v424 = vsel %vm422, %v416, 0.0
      %v425 = vsel %vm423, %v417, 0.0
      %426 = vrot.lane.b32.xlu0 %v302, 112
      %v427 = vpop.permute.xlu0 %426
      %428 = vrot.lane.b32.xlu0 %v340, 112
      %v429 = vpop.permute.xlu0 %428
      %vm430 = vcmp.lt.s32.totalorder %v305, 112
      %v431 = vsel %vm430, %v427, %v429
      %v432 = vsel %vm430, %v429, %v427
      %v433 = vsel %vm333, 1, 0
      %v434 = vsel %vm334, 1, 0
      %vm435 = vcmp.eq.s32.totalorder %v433, 1
      %vm436 = vcmp.eq.s32.totalorder %v434, 1
      %v437 = vsel %vm435, %v431, 0.0
      %v438 = vsel %vm436, %v432, 0.0
      %439 = vrot.lane.b32.xlu0 %v302, 111
      %v440 = vpop.permute.xlu0 %439
      %441 = vrot.lane.b32.xlu0 %v340, 111
      %v442 = vpop.permute.xlu0 %441
      %vm443 = vcmp.lt.s32.totalorder %v305, 111
      %v444 = vsel %vm443, %v440, %v442
      %v445 = vsel %vm443, %v442, %v440
      %vm446 = vmand %vm333, %vm337
      %vm447 = vmand %vm334, %vm338
      %v448 = vsel %vm446, 1, 0
      %v449 = vsel %vm447, 1, 0
      %vm450 = vcmp.eq.s32.totalorder %v448, 1
      %vm451 = vcmp.eq.s32.totalorder %v449, 1
      %v452 = vsel %vm450, %v444, 0.0
      %v453 = vsel %vm451, %v445, 0.0
      %v456 = vrot.slane %v368, 4
      %v457 = vrot.slane %v369, 4
      %v462 = vrot.slane %v396, 4
      %v463 = vrot.slane %v397, 4
      %v468 = vrot.slane %v409, 4
      %v469 = vrot.slane %v410, 4
      %v474 = vrot.slane %v437, 4
      %v475 = vrot.slane %v438, 4
      %vm478 = vcmask 1043456
      %v479 = vsel %vm478, %v355, %v456
      %v480 = vsel %vm478, %v356, %v457
      %v481 = vsel %vm478, %v383, %v462
      %v482 = vsel %vm478, %v384, %v463
      %v483 = vsel %vm478, %v302, %v468
      %v484 = vsel %vm478, %v340, %v469
      %v485 = vsel %vm478, %v424, %v474
      %v486 = vsel %vm478, %v425, %v475
      %vm487 = vcmask 293888
      %v489 = vsel %vm487, %v303, 0
      %v492 = vsel %vm478, %v452, 0
      %v495 = vsel %vm478, %v453, 0
      %497 = vmatprep.subr.mxu0 %v480
      %498 = vmatpush1.msra.mxu0 %v479
      %499 = vmatprep.subr.mxu0 %v482
      %500 = vmatpush1.msra.mxu0 %v481
      %501 = vmatprep.subr.mxu0 %v484
      %502 = vmatpush1.msra.mxu0 %v483
      %503 = vmatprep.subr.mxu0 %v486
      %504 = vmatpush1.msra.mxu0 %v485
      %505 = vmatprep.subr.mxu0 %v495
      %506 = vmatpush1.msra.mxu0 %v492
      %507 = vmatprep.subr.mxu0 0.0
      %508 = vmatpush1.msra.mxu0 0.0
      %509 = vmatprep.subr.mxu0 0.0
      %510 = vmatpush1.msra.mxu0 0.0
      %511 = vmatprep.subr.mxu0 0.0
      %512 = vmatpush1.msra.mxu0 0.0
      %513 = vmatprep.subr.mxu0 0.0
      %514 = vmatpush1.msra.mxu0 0.0
      %515 = vmatprep.subr.mxu0 0.0
      %516 = vmatpush1.msra.mxu0 0.0
      %517 = vmatprep.subr.mxu0 0.0
      %518 = vmatpush1.msra.mxu0 0.0
      %519 = vmatprep.subr.mxu0 0.0
      %520 = vmatpush1.msra.mxu0 0.0
      %521 = vmatprep.subr.mxu0 0.0
      %522 = vmatpush1.msra.mxu0 0.0
      %523 = vmatprep.subr.mxu0 0.0
      %524 = vmatpush1.msra.mxu0 0.0
      %525 = vmatprep.subr.mxu0 0.0
      %526 = vmatpush1.msra.mxu0 0.0
      %527 = vmatprep.subr.mxu0 0.0
      %528 = vmatpush1.msra.mxu0 0.0
      %529 = vmatprep.subr.mxu0 0.0
      %530 = vmatpush1.msra.mxu0 0.0
      %531 = vmatprep.subr.mxu0 0.0
      %532 = vmatpush1.msra.mxu0 0.0
      %533 = vmatprep.subr.mxu0 0.0
      %534 = vmatpush1.msra.mxu0 0.0
      %535 = vmatprep.subr.mxu0 0.0
      %536 = vmatpush1.msra.mxu0 0.0
      %537 = vmatprep.subr.mxu0 0.0
      %538 = vmatpush1.msra.mxu0 0.0
      %539 = vmatprep.subr.mxu0 0.0
      %540 = vmatpush1.msra.mxu0 0.0
      %541 = vmatprep.subr.mxu0 0.0
      %542 = vmatpush1.msra.mxu0 0.0
      %543 = vmatprep.subr.mxu0 0.0
      %544 = vmatpush1.msra.mxu0 0.0
      %545 = vmatprep.subr.mxu0 0.0
      %546 = vmatpush1.msra.mxu0 0.0
      %547 = vmatprep.subr.mxu0 0.0
      %548 = vmatpush1.msra.mxu0 0.0
      %549 = vmatprep.subr.mxu0 0.0
      %550 = vmatpush1.msra.mxu0 0.0
      %551 = vmatprep.subr.mxu0 0.0
      %552 = vmatpush1.msra.mxu0 0.0
      %553 = vmatprep.subr.mxu0 0.0
      %554 = vmatpush1.msra.mxu0 0.0
      %555 = vmatprep.subr.mxu0 0.0
      %556 = vmatpush1.msra.mxu0 0.0
      %557 = vmatprep.subr.mxu0 0.0
      %558 = vmatpush1.msra.mxu0 0.0
      %559 = vmatprep.subr.mxu0 0.0
      %560 = vmatpush1.msra.mxu0 0.0
      %561 = vmatprep.mubr.f32.mxu0 0.0
      %562 = vmatmul.mubr.f32.gmra.mrb[0].mxu0 %v489
      %v563 = vpop.f32.mrb[0].mxu0
      %v564 = vadd.f32 0.0, %v563
      %v565 = vpop.f32.mrb[0].mxu0
      %v566 = vadd.f32 0.0, %v565
      %567 = vdwg.mxu0
      %v570 = vcombine.low %v564, %v566
      %572 = vst [vmem:[%s264] sm:$0xff] %v570
      %573 = vmatprep.subr.mxu0 0.0
      %574 = vmatpush1.msra.mxu0 1.0
      %575 = vmatprep.subr.mxu0 0.0
      %576 = vmatpush1.msra.mxu0 1.0
      %577 = vmatprep.subr.mxu0 0.0
      %578 = vmatpush1.msra.mxu0 1.0
      %579 = vmatprep.subr.mxu0 0.0
      %580 = vmatpush1.msra.mxu0 1.0
      %581 = vmatprep.subr.mxu0 0.0
      %582 = vmatpush1.msra.mxu0 1.0
      %583 = vmatprep.subr.mxu0 0.0
      %584 = vmatpush1.msra.mxu0 1.0
      %585 = vmatprep.subr.mxu0 0.0
      %586 = vmatpush1.msra.mxu0 1.0
      %587 = vmatprep.subr.mxu0 0.0
      %588 = vmatpush1.msra.mxu0 1.0
      %589 = vmatprep.subr.mxu0 0.0
      %590 = vmatpush1.msra.mxu0 1.0
      %591 = vmatprep.subr.mxu0 0.0
      %592 = vmatpush1.msra.mxu0 1.0
      %593 = vmatprep.subr.mxu0 0.0
      %594 = vmatpush1.msra.mxu0 1.0
      %595 = vmatprep.subr.mxu0 0.0
      %596 = vmatpush1.msra.mxu0 1.0
      %597 = vmatprep.subr.mxu0 0.0
      %598 = vmatpush1.msra.mxu0 1.0
      %599 = vmatprep.subr.mxu0 0.0
      %600 = vmatpush1.msra.mxu0 1.0
      %601 = vmatprep.subr.mxu0 0.0
      %602 = vmatpush1.msra.mxu0 1.0
      %603 = vmatprep.subr.mxu0 0.0
      %604 = vmatpush1.msra.mxu0 1.0
      %605 = vmatprep.subr.mxu0 0.0
      %606 = vmatpush1.msra.mxu0 1.0
      %607 = vmatprep.subr.mxu0 0.0
      %608 = vmatpush1.msra.mxu0 1.0
      %609 = vmatprep.subr.mxu0 0.0
      %610 = vmatpush1.msra.mxu0 1.0
      %611 = vmatprep.subr.mxu0 0.0
      %612 = vmatpush1.msra.mxu0 1.0
      %613 = vmatprep.subr.mxu0 0.0
      %614 = vmatpush1.msra.mxu0 1.0
      %615 = vmatprep.subr.mxu0 0.0
      %616 = vmatpush1.msra.mxu0 1.0
      %617 = vmatprep.subr.mxu0 0.0
      %618 = vmatpush1.msra.mxu0 1.0
      %619 = vmatprep.subr.mxu0 0.0
      %620 = vmatpush1.msra.mxu0 1.0
      %621 = vmatprep.subr.mxu0 0.0
      %622 = vmatpush1.msra.mxu0 1.0
      %623 = vmatprep.subr.mxu0 0.0
      %624 = vmatpush1.msra.mxu0 1.0
      %625 = vmatprep.subr.mxu0 0.0
      %626 = vmatpush1.msra.mxu0 1.0
      %627 = vmatprep.subr.mxu0 0.0
      %628 = vmatpush1.msra.mxu0 1.0
      %629 = vmatprep.subr.mxu0 0.0
      %630 = vmatpush1.msra.mxu0 1.0
      %631 = vmatprep.subr.mxu0 0.0
      %632 = vmatpush1.msra.mxu0 1.0
      %633 = vmatprep.subr.mxu0 0.0
      %634 = vmatpush1.msra.mxu0 1.0
      %635 = vmatprep.subr.mxu0 0.0
      %636 = vmatpush1.msra.mxu0 1.0
      %637 = vmatprep.mubr.f32.mxu0 %v566
      %638 = vmatmul.mubr.f32.gmra.mrb[0].mxu0 %v564
      %v639 = vpop.f32.mrb[0].mxu0
      %v640 = vadd.f32 0.0, %v639
      %v641 = vpop.f32.mrb[0].mxu0
      %642 = vdwg.mxu0
      %v643 = vmul.f32 %v564, %v564
      %v644 = vmul.f32 %v566, %v566
      %645 = vmatprep.subr.mxu0 0.0
      %646 = vmatpush1.msra.mxu0 1.0
      %647 = vmatprep.subr.mxu0 0.0
      %648 = vmatpush1.msra.mxu0 1.0
      %649 = vmatprep.subr.mxu0 0.0
      %650 = vmatpush1.msra.mxu0 1.0
      %651 = vmatprep.subr.mxu0 0.0
      %652 = vmatpush1.msra.mxu0 1.0
      %653 = vmatprep.subr.mxu0 0.0
      %654 = vmatpush1.msra.mxu0 1.0
      %655 = vmatprep.subr.mxu0 0.0
      %656 = vmatpush1.msra.mxu0 1.0
      %657 = vmatprep.subr.mxu0 0.0
      %658 = vmatpush1.msra.mxu0 1.0
      %659 = vmatprep.subr.mxu0 0.0
      %660 = vmatpush1.msra.mxu0 1.0
      %661 = vmatprep.subr.mxu0 0.0
      %662 = vmatpush1.msra.mxu0 1.0
      %663 = vmatprep.subr.mxu0 0.0
      %664 = vmatpush1.msra.mxu0 1.0
      %665 = vmatprep.subr.mxu0 0.0
      %666 = vmatpush1.msra.mxu0 1.0
      %667 = vmatprep.subr.mxu0 0.0
      %668 = vmatpush1.msra.mxu0 1.0
      %669 = vmatprep.subr.mxu0 0.0
      %670 = vmatpush1.msra.mxu0 1.0
      %671 = vmatprep.subr.mxu0 0.0
      %672 = vmatpush1.msra.mxu0 1.0
      %673 = vmatprep.subr.mxu0 0.0
      %674 = vmatpush1.msra.mxu0 1.0
      %675 = vmatprep.subr.mxu0 0.0
      %676 = vmatpush1.msra.mxu0 1.0
      %677 = vmatprep.subr.mxu0 0.0
      %678 = vmatpush1.msra.mxu0 1.0
      %679 = vmatprep.subr.mxu0 0.0
      %680 = vmatpush1.msra.mxu0 1.0
      %681 = vmatprep.subr.mxu0 0.0
      %682 = vmatpush1.msra.mxu0 1.0
      %683 = vmatprep.subr.mxu0 0.0
      %684 = vmatpush1.msra.mxu0 1.0
      %685 = vmatprep.subr.mxu0 0.0
      %686 = vmatpush1.msra.mxu0 1.0
      %687 = vmatprep.subr.mxu0 0.0
      %688 = vmatpush1.msra.mxu0 1.0
      %689 = vmatprep.subr.mxu0 0.0
      %690 = vmatpush1.msra.mxu0 1.0
      %691 = vmatprep.subr.mxu0 0.0
      %692 = vmatpush1.msra.mxu0 1.0
      %693 = vmatprep.subr.mxu0 0.0
      %694 = vmatpush1.msra.mxu0 1.0
      %695 = vmatprep.subr.mxu0 0.0
      %696 = vmatpush1.msra.mxu0 1.0
      %697 = vmatprep.subr.mxu0 0.0
      %698 = vmatpush1.msra.mxu0 1.0
      %699 = vmatprep.subr.mxu0 0.0
      %700 = vmatpush1.msra.mxu0 1.0
      %701 = vmatprep.subr.mxu0 0.0
      %702 = vmatpush1.msra.mxu0 1.0
      %703 = vmatprep.subr.mxu0 0.0
      %704 = vmatpush1.msra.mxu0 1.0
      %705 = vmatprep.subr.mxu0 0.0
      %706 = vmatpush1.msra.mxu0 1.0
      %707 = vmatprep.subr.mxu0 0.0
      %708 = vmatpush1.msra.mxu0 1.0
      %709 = vmatprep.mubr.f32.mxu0 %v644
      %710 = vmatmul.mubr.f32.gmra.mrb[0].mxu0 %v643
      %v711 = vpop.f32.mrb[0].mxu0
      %v712 = vadd.f32 0.0, %v711
      %v713 = vpop.f32.mrb[0].mxu0
      %714 = vdwg.mxu0
      %vm715 = vcmask 3072
      %716 = vst.msk [vmem:[%s268] sm:$0xf] %vm715, %v640
      %717 = vst.msk [vmem:[%s272] sm:$0xf] %vm715, %v712
      %p718 = scmp.lt.s32.totalorder %s18, 1
      %s719 = scalar_select %p718, %s18, 1
      %s720 = smul.addr %s719, 2
      %s721 = smul.addr %s720, 4
      %s722 = scalar_lea.vmem %s4, %s721
      %p723 = scmp.lt.s32.totalorder %s18, 1
      %s724 = scalar_select %p723, %s18, 1
      %s725 = smul.addr %s724, 4
      %s726 = scalar_lea.vmem %s5, %s725
      %p727 = scmp.lt.s32.totalorder %s18, 1
      %s728 = scalar_select %p727, %s18, 1
      %s729 = smul.addr %s728, 4
      %s730 = scalar_lea.vmem %s6, %s729
      // Predicated region
      $region37: #{basic_block_pallas.4} parent=35 // pred_check
        %p731 = pneg %p125
      $region38: #{basic_block_pallas.4} parent=35 // pred_check_branch
        %733 = sbr.rel (%p731) target = $region40
      $region39: #{basic_block_pallas.4} parent=35 // pred_region
        _
      $region40: #{basic_block_pallas.4} parent=35 // pred_fallthru
        _
      // Predicated region
      $region41: #{basic_block_pallas.4} parent=35 // pred_check
        %p734 = pneg %p151
      $region42: #{basic_block_pallas.4} parent=35 // pred_check_branch
        %736 = sbr.rel (%p734) target = $region44
      $region43: #{basic_block_pallas.4} parent=35 // pred_region
        _
      $region44: #{basic_block_pallas.4} parent=35 // pred_fallthru
        _
      // Predicated region
      $region45: #{basic_block_pallas.4} parent=35 // pred_check
        %p737 = pneg %p177
      $region46: #{basic_block_pallas.4} parent=35 // pred_check_branch
        %739 = sbr.rel (%p737) target = $region48
      $region47: #{basic_block_pallas.4} parent=35 // pred_region
        _
      $region48: #{basic_block_pallas.4} parent=35 // pred_fallthru
        _
    $region36: #{basic_block_pallas.4} parent=5 // pred_fallthru
      _
    %p740 = scmp.le.s32.totalorder 2, %s13
    // Predicated region
    $region49: #{basic_block_pallas.4} parent=5 // pred_check
      %p741 = pneg %p740
    $region50: #{basic_block_pallas.4} parent=5 // pred_check_branch
      %743 = sbr.rel (%p741) target = $region52
    $region51: #{basic_block_pallas.4} parent=5 // pred_region
      %s744 = ssub.s32 %s13, 2
      // Predicated region
      $region53: #{basic_block_pallas.4} parent=51 // pred_check
        %p745 = pneg %p131
      $region54: #{basic_block_pallas.4} parent=51 // pred_check_branch
        %747 = sbr.rel (%p745) target = $region56
      $region55: #{basic_block_pallas.4} parent=51 // pred_region
        %p748 = scmp.lt.s32.totalorder %s19, 1
        %s749 = scalar_select %p748, %s19, 1
        %s750 = smul.addr %s749, 2
        %s751 = smul.addr %s750, 4
        %s752 = scalar_lea.vmem %s4, %s751
      $region56: #{basic_block_pallas.4} parent=51 // pred_fallthru
        _
      // Predicated region
      $region57: #{basic_block_pallas.4} parent=51 // pred_check
        %p753 = pneg %p157
      $region58: #{basic_block_pallas.4} parent=51 // pred_check_branch
        %755 = sbr.rel (%p753) target = $region60
      $region59: #{basic_block_pallas.4} parent=51 // pred_region
        %p756 = scmp.lt.s32.totalorder %s19, 1
        %s757 = scalar_select %p756, %s19, 1
        %s758 = smul.addr %s757, 4
        %s759 = scalar_lea.vmem %s5, %s758
      $region60: #{basic_block_pallas.4} parent=51 // pred_fallthru
        _
      // Predicated region
      $region61: #{basic_block_pallas.4} parent=51 // pred_check
        %p760 = pneg %p183
      $region62: #{basic_block_pallas.4} parent=51 // pred_check_branch
        %762 = sbr.rel (%p760) target = $region64
      $region63: #{basic_block_pallas.4} parent=51 // pred_region
        %p763 = scmp.lt.s32.totalorder %s19, 1
        %s764 = scalar_select %p763, %s19, 1
        %s765 = smul.addr %s764, 4
        %s766 = scalar_lea.vmem %s6, %s765
      $region64: #{basic_block_pallas.4} parent=51 // pred_fallthru
        _
    $region52: #{basic_block_pallas.4} parent=5 // pred_fallthru
      _
  $region6: #{basic_block_pallas.4} parent=0 // loop_footer
    %s17 = sadd.s32 1, %s13
  $region7: #{basic_block_pallas.4} parent=0 // loop_footer_branch
    %12 = sbr.rel target = $region3
  $region8: #{basic_block_pallas.4} parent=0 // loop_exit
    _

</llo_original>
